<compile_context>
chip_gen: v6e
topology: v6e:2x2x1
jax: 0.10.0
libtpu: 0.0.40
codegen_flags: <defaults>
</compile_context>

<pallas_src>
import functools

import jax
import jax.numpy as jnp
from jax.experimental import pallas as pl
from jax.experimental.pallas import tpu as pltpu

LANE = 128

_COMPILER_PARAMS = pltpu.CompilerParams(
    dimension_semantics=("parallel",),
    vmem_limit_bytes=32 * 1024 * 1024,
)


# ----------------------------------------------------------------------------
# Pallas kernels
# ----------------------------------------------------------------------------
def _conv_relu_pool_kernel(a_ref, w_ref, b_ref, o_ref):
    """Fused im2col-matmul + bias + ReLU + 2x2 max-pool.

    a_ref: (4, tm, K)  bf16  im2col patches; leading axis = the 4 positions of
                             each 2x2 pooling window, rows = pooled pixels.
    w_ref: (K, 128)    bf16  flattened conv weights, Cout zero-padded to 128.
    b_ref: (1, 128)    f32   bias, zero-padded.
    o_ref: (tm, 128)   f32   pooled activations (lane-dense output).
    """
    w = w_ref[...]
    b = b_ref[...]

    def branch(i):
        acc = jnp.dot(a_ref[i], w, preferred_element_type=jnp.float32)
        return jnp.maximum(acc + b, 0.0)

    o_ref[...] = jnp.maximum(jnp.maximum(branch(0), branch(1)),
                             jnp.maximum(branch(2), branch(3)))


def _fc_stack_kernel(n_valid, x_ref, w1_ref, b1_ref, w2_ref, b2_ref,
                     w3_ref, b3_ref, o_ref):
    """relu(fc1) -> relu(fc2) -> relu(fc3) -> log_softmax, fully in VMEM."""
    h = jnp.dot(x_ref[...], w1_ref[...], preferred_element_type=jnp.float32)
    h = jnp.maximum(h + b1_ref[...], 0.0)
    h = jnp.dot(h, w2_ref[...], preferred_element_type=jnp.float32)
    h = jnp.maximum(h + b2_ref[...], 0.0)
    h = jnp.dot(h, w3_ref[...], preferred_element_type=jnp.float32)
    h = jnp.maximum(h + b3_ref[...], 0.0)   # original module: ReLU on fc3 too

    # Mask the zero-padded logit columns before log_softmax.
    col = jax.lax.broadcasted_iota(jnp.int32, h.shape, dimension=1)
    logits = jnp.where(col < n_valid, h, -1e30)
    m = jnp.max(logits, axis=-1, keepdims=True)
    z = logits - m
    lse = jnp.log(jnp.sum(jnp.exp(z), axis=-1, keepdims=True))
    o_ref[...] = z - lse


# ----------------------------------------------------------------------------
# Kernel wrappers
# ----------------------------------------------------------------------------
def _row_tile(rows, max_tile=512):
    # Full extent when small (always legal), else a 512-row tile (multiple of 16).
    return rows if rows <= max_tile else max_tile


def conv_relu_pool(patches, wmat, bvec):
    """patches: (4, R, K) bf16; wmat: (K,128) bf16; bvec: (1,128) f32 -> (R,128) f32."""
    _, R, K = patches.shape
    tm = _row_tile(R)
    flops = 2 * 4 * R * K * LANE
    bytes_accessed = (patches.size * patches.dtype.itemsize
                      + wmat.size * wmat.dtype.itemsize
                      + bvec.size * 4 + R * LANE * 4)
    return pl.pallas_call(
        _conv_relu_pool_kernel,
        out_shape=jax.ShapeDtypeStruct((R, LANE), jnp.float32),
        grid=(pl.cdiv(R, tm),),
        in_specs=[
            pl.BlockSpec((4, tm, K), lambda i: (0, i, 0)),
            pl.BlockSpec((K, LANE), lambda i: (0, 0)),
            pl.BlockSpec((1, LANE), lambda i: (0, 0)),
        ],
        out_specs=pl.BlockSpec((tm, LANE), lambda i: (i, 0)),
        compiler_params=_COMPILER_PARAMS,
        cost_estimate=pl.CostEstimate(flops=int(flops), transcendentals=0,
                                      bytes_accessed=int(bytes_accessed)),
    )(patches, wmat, bvec)


def fc_stack_log_softmax(feat, w1, b1, w2, b2, w3, b3, n_out):
    """Fused fc1->fc2->fc3->log_softmax.  feat: (B, 256) f32 -> (B, n_out) f32."""
    B, kin = feat.shape
    npad = w3.shape[1]
    bm = min(B, 512) if B % 8 == 0 else B
    flops = 2 * B * (kin * LANE + LANE * LANE + LANE * npad)
    bytes_accessed = 4 * (feat.size + w1.size + w2.size + w3.size
                          + b1.size + b2.size + b3.size + B * npad)
    out = pl.pallas_call(
        functools.partial(_fc_stack_kernel, n_out),
        out_shape=jax.ShapeDtypeStruct((B, npad), jnp.float32),
        grid=(pl.cdiv(B, bm),),
        in_specs=[
            pl.BlockSpec((bm, kin), lambda i: (i, 0)),
            pl.BlockSpec((kin, LANE), lambda i: (0, 0)),
            pl.BlockSpec((1, LANE), lambda i: (0, 0)),
            pl.BlockSpec((LANE, LANE), lambda i: (0, 0)),
            pl.BlockSpec((1, LANE), lambda i: (0, 0)),
            pl.BlockSpec((LANE, npad), lambda i: (0, 0)),
            pl.BlockSpec((1, npad), lambda i: (0, 0)),
        ],
        out_specs=pl.BlockSpec((bm, npad), lambda i: (i, 0)),
        compiler_params=_COMPILER_PARAMS,
        cost_estimate=pl.CostEstimate(flops=int(flops),
                                      transcendentals=int(B * npad),
                                      bytes_accessed=int(bytes_accessed)),
    )(feat, w1, b1, w2, b2, w3, b3)
    return out[:, :n_out]


# ----------------------------------------------------------------------------
# Glue: pool-window-major im2col + forward pass
# ----------------------------------------------------------------------------
def _im2col_pool_major(x_nhwc, kh, kw):
    """NHWC -> (4, B*Hp*Wp, C*kh*kw) bf16 patches, pool-window-major.

    Feature axis ordered (c, i, j) to match PyTorch's (Cout, Cin, KH, KW)
    weight flattening.  Leading axis enumerates the 4 positions of each 2x2
    pooling window; rows enumerate (batch, pooled_row, pooled_col).
    """
    B, H, W, C = x_nhwc.shape
    oh, ow = H - kh + 1, W - kw + 1
    hp, wp = oh // 2, ow // 2
    K = C * kh * kw
    cols = []
    for c in range(C):
        for i in range(kh):
            for j in range(kw):
                cols.append(x_nhwc[:, i:i + oh, j:j + ow, c])
    patches = jnp.stack(cols, axis=-1)                     # (B, oh, ow, K)
    patches = patches.reshape(B, hp, 2, wp, 2, K)
    patches = jnp.transpose(patches, (2, 4, 0, 1, 3, 5))   # (2, 2, B, hp, wp, K)
    patches = patches.reshape(4, B * hp * wp, K)
    return patches.astype(jnp.bfloat16), (hp, wp)


def conv2d_relu_pool(x_nhwc, wmat, bvec, cout):
    B = x_nhwc.shape[0]
    patches, (hp, wp) = _im2col_pool_major(x_nhwc, 5, 5)
    out = conv_relu_pool(patches, wmat, bvec)              # (B*hp*wp, 128)
    return out[:, :cout].reshape(B, hp, wp, cout)          # NHWC


def convnet_forward(kp, x_nchw):
    B = x_nchw.shape[0]
    x = jnp.transpose(x_nchw, (0, 2, 3, 1)).astype(jnp.float32)     # NHWC
    x = conv2d_relu_pool(x, kp["conv1_w"], kp["conv1_b"], 6)        # (B,12,12,6)
    x = conv2d_relu_pool(x, kp["conv2_w"], kp["conv2_b"], 16)       # (B,4,4,16)
    feat = x.reshape(B, 16 * 4 * 4)                                 # NHWC flatten
    logp = fc_stack_log_softmax(feat,
                                kp["fc1_w"], kp["fc1_b"],
                                kp["fc2_w"], kp["fc2_b"],
                                kp["fc3_w"], kp["fc3_b"],
                                kp["n_out"])
    return logp.reshape(B, 1, kp["n_out"])


# ----------------------------------------------------------------------------
# Parameters (PyTorch layout) + one-time conversion to kernel layout
# ----------------------------------------------------------------------------
def init_params(key, output_size):
    ks = jax.random.split(key, 10)
    scale = 0.1
    return {
        "conv1_w": scale * jax.random.normal(ks[0], (6, 1, 5, 5), jnp.float32),
        "conv1_b": scale * jax.random.normal(ks[1], (6,), jnp.float32),
        "conv2_w": scale * jax.random.normal(ks[2], (16, 6, 5, 5), jnp.float32),
        "conv2_b": scale * jax.random.normal(ks[3], (16,), jnp.float32),
        "fc1_w": scale * jax.random.normal(ks[4], (120, 16 * 4 * 4), jnp.float32),
        "fc1_b": scale * jax.random.normal(ks[5], (120,), jnp.float32),
        "fc2_w": scale * jax.random.normal(ks[6], (84, 120), jnp.float32),
        "fc2_b": scale * jax.random.normal(ks[7], (84,), jnp.float32),
        "fc3_w": scale * jax.random.normal(ks[8], (output_size, 84), jnp.float32),
        "fc3_b": scale * jax.random.normal(ks[9], (output_size,), jnp.float32),
    }


def prepare_kernel_params(params, n_out):
    """One-time reshape/transpose/zero-pad of PyTorch-layout params."""
    def pad2(m, rows, cols, dtype):
        m = m.astype(jnp.float32)
        m = jnp.pad(m, ((0, rows - m.shape[0]), (0, cols - m.shape[1])))
        return m.astype(dtype)

    npad_out = max(LANE, ((n_out + LANE - 1) // LANE) * LANE)

    c1 = params["conv1_w"].reshape(6, -1).T                       # (25, 6)
    c2 = params["conv2_w"].reshape(16, -1).T                      # (150, 16)

    # fc1 columns permuted (C,H,W) -> (H,W,C) so the NHWC flatten feeds it directly.
    f1 = params["fc1_w"].reshape(120, 16, 4, 4)
    f1 = jnp.transpose(f1, (0, 2, 3, 1)).reshape(120, 256).T      # (256, 120)
    f2 = params["fc2_w"].T                                        # (120, 84)
    f3 = params["fc3_w"].T                                        # (84, n_out)

    return {
        "conv1_w": pad2(c1, 25, LANE, jnp.bfloat16),
        "conv1_b": pad2(params["conv1_b"].reshape(1, -1), 1, LANE, jnp.float32),
        "conv2_w": pad2(c2, 150, LANE, jnp.bfloat16),
        "conv2_b": pad2(params["conv2_b"].reshape(1, -1), 1, LANE, jnp.float32),
        "fc1_w": pad2(f1, 256, LANE, jnp.float32),
        "fc1_b": pad2(params["fc1_b"].reshape(1, -1), 1, LANE, jnp.float32),
        "fc2_w": pad2(f2, LANE, LANE, jnp.float32),
        "fc2_b": pad2(params["fc2_b"].reshape(1, -1), 1, LANE, jnp.float32),
        "fc3_w": pad2(f3, LANE, npad_out, jnp.float32),
        "fc3_b": pad2(params["fc3_b"].reshape(1, -1), 1, npad_out, jnp.float32),
        "n_out": n_out,
    }


# ----------------------------------------------------------------------------
# Pure-XLA reference (mirrors the PyTorch module exactly, f32)
# ----------------------------------------------------------------------------
def reference_forward(params, x):
    dn = ("NCHW", "OIHW", "NCHW")
    y = jax.lax.conv_general_dilated(x, params["conv1_w"], (1, 1), "VALID",
                                     dimension_numbers=dn)
    y = jax.nn.relu(y + params["conv1_b"][None, :, None, None])
    y = jax.lax.reduce_window(y, -jnp.inf, jax.lax.max,
                              (1, 1, 2, 2), (1, 1, 2, 2), "VALID")
    y = jax.lax.conv_general_dilated(y, params["conv2_w"], (1, 1), "VALID",
                                     dimension_numbers=dn)
    y = jax.nn.relu(y + params["conv2_b"][None, :, None, None])
    y = jax.lax.reduce_window(y, -jnp.inf, jax.lax.max,
                              (1, 1, 2, 2), (1, 1, 2, 2), "VALID")
    b = x.shape[0]
    h = y.reshape(b, 1, -1)
    h = jax.nn.relu(h @ params["fc1_w"].T + params["fc1_b"])
    h = jax.nn.relu(h @ params["fc2_w"].T + params["fc2_b"])
    h = jax.nn.relu(h @ params["fc3_w"].T + params["fc3_b"])
    return jax.nn.log_softmax(h, axis=2)


if __name__ == "__main__":
    key = jax.random.PRNGKey(0)
    k_x, k_p = jax.random.split(key)

    output_size = 10
    # Architecture implies 28x28 single-channel inputs (16*4*4 flatten size).
    x = jax.random.normal(k_x, (2, 1, 28, 28), jnp.float32)
    params = init_params(k_p, output_size)
    kparams = prepare_kernel_params(params, output_size)

    fwd = jax.jit(functools.partial(convnet_forward, kparams))
    out = jax.block_until_ready(fwd(x))

    assert out.shape == (2, 1, output_size), out.shape
    # log_softmax rows must sum to ~1 in probability space.
    assert jnp.allclose(jnp.sum(jnp.exp(out), axis=-1), 1.0, atol=1e-4)
    # Compare against a pure-XLA f32 reference (kernel uses bf16 conv operands).
    ref = reference_forward(params, x)
    err = float(jnp.max(jnp.abs(out - ref)))
    assert err < 0.1, f"max abs err vs reference: {err}"
    print("KERNEL_OK")
</pallas_src>

<mosaic_0001>
module attributes {stable_mosaic.version = 11 : i64} {
  func.func @_conv_relu_pool_kernel(%arg0: i32, %arg1: memref<4x288x25xbf16, #tpu.memory_space<vmem>>, %arg2: memref<25x128xbf16, #tpu.memory_space<vmem>>, %arg3: memref<1x128xf32, #tpu.memory_space<vmem>>, %arg4: memref<288x128xf32, #tpu.memory_space<vmem>>) attributes {dimension_semantics = [#tpu.dimension_semantics<parallel>], iteration_bounds = array<i64: 1>, scalar_prefetch = 0 : i64, scratch_operands = 0 : i64, tpu.core_type = #tpu.core_type<tc>, window_params = [{transform_indices = @transform_0, window_bounds = array<i64: 4, 288, 25>}, {pipeline_mode = #tpu.pipeline_mode<synchronous>, transform_indices = @transform_1, window_bounds = array<i64: 25, 128>}, {pipeline_mode = #tpu.pipeline_mode<synchronous>, transform_indices = @transform_2, window_bounds = array<i64: 1, 128>}, {transform_indices = @transform_3, window_bounds = array<i64: 288, 128>}]} {
    %c0 = arith.constant 0 : index
    %c0_0 = arith.constant 0 : index
    %0 = vector.load %arg2[%c0, %c0_0] : memref<25x128xbf16, #tpu.memory_space<vmem>>, vector<25x128xbf16>
    %c0_1 = arith.constant 0 : index
    %c0_2 = arith.constant 0 : index
    %1 = vector.load %arg3[%c0_1, %c0_2] : memref<1x128xf32, #tpu.memory_space<vmem>>, vector<1x128xf32>
    %c0_3 = arith.constant 0 : index
    %c0_4 = arith.constant 0 : index
    %c0_5 = arith.constant 0 : index
    %2 = vector.load %arg1[%c0_3, %c0_4, %c0_5] : memref<4x288x25xbf16, #tpu.memory_space<vmem>>, vector<1x288x25xbf16>
    %3 = vector.shape_cast %2 : vector<1x288x25xbf16> to vector<288x25xbf16>
    %cst = arith.constant dense<0.000000e+00> : vector<288x128xf32>
    %4 = tpu.matmul %3, %0, %cst {dimension_numbers = #tpu.dot_dimension_numbers<[1], [0], [0], [1], [0, 0, 1, 1], [], []>} : vector<288x25xbf16>, vector<25x128xbf16>, vector<288x128xf32> -> vector<288x128xf32>
    %5 = vector.broadcast %1 : vector<1x128xf32> to vector<288x128xf32>
    %6 = arith.addf %4, %5 : vector<288x128xf32>
    %cst_6 = arith.constant 0.000000e+00 : f32
    %7 = vector.broadcast %cst_6 : f32 to vector<288x128xf32>
    %8 = arith.maximumf %6, %7 : vector<288x128xf32>
    %c1 = arith.constant 1 : index
    %c0_7 = arith.constant 0 : index
    %c0_8 = arith.constant 0 : index
    %9 = vector.load %arg1[%c1, %c0_7, %c0_8] : memref<4x288x25xbf16, #tpu.memory_space<vmem>>, vector<1x288x25xbf16>
    %10 = vector.shape_cast %9 : vector<1x288x25xbf16> to vector<288x25xbf16>
    %cst_9 = arith.constant dense<0.000000e+00> : vector<288x128xf32>
    %11 = tpu.matmul %10, %0, %cst_9 {dimension_numbers = #tpu.dot_dimension_numbers<[1], [0], [0], [1], [0, 0, 1, 1], [], []>} : vector<288x25xbf16>, vector<25x128xbf16>, vector<288x128xf32> -> vector<288x128xf32>
    %12 = vector.broadcast %1 : vector<1x128xf32> to vector<288x128xf32>
    %13 = arith.addf %11, %12 : vector<288x128xf32>
    %cst_10 = arith.constant 0.000000e+00 : f32
    %14 = vector.broadcast %cst_10 : f32 to vector<288x128xf32>
    %15 = arith.maximumf %13, %14 : vector<288x128xf32>
    %16 = arith.maximumf %8, %15 : vector<288x128xf32>
    %c2 = arith.constant 2 : index
    %c0_11 = arith.constant 0 : index
    %c0_12 = arith.constant 0 : index
    %17 = vector.load %arg1[%c2, %c0_11, %c0_12] : memref<4x288x25xbf16, #tpu.memory_space<vmem>>, vector<1x288x25xbf16>
    %18 = vector.shape_cast %17 : vector<1x288x25xbf16> to vector<288x25xbf16>
    %cst_13 = arith.constant dense<0.000000e+00> : vector<288x128xf32>
    %19 = tpu.matmul %18, %0, %cst_13 {dimension_numbers = #tpu.dot_dimension_numbers<[1], [0], [0], [1], [0, 0, 1, 1], [], []>} : vector<288x25xbf16>, vector<25x128xbf16>, vector<288x128xf32> -> vector<288x128xf32>
    %20 = vector.broadcast %1 : vector<1x128xf32> to vector<288x128xf32>
    %21 = arith.addf %19, %20 : vector<288x128xf32>
    %cst_14 = arith.constant 0.000000e+00 : f32
    %22 = vector.broadcast %cst_14 : f32 to vector<288x128xf32>
    %23 = arith.maximumf %21, %22 : vector<288x128xf32>
    %c3 = arith.constant 3 : index
    %c0_15 = arith.constant 0 : index
    %c0_16 = arith.constant 0 : index
    %24 = vector.load %arg1[%c3, %c0_15, %c0_16] : memref<4x288x25xbf16, #tpu.memory_space<vmem>>, vector<1x288x25xbf16>
    %25 = vector.shape_cast %24 : vector<1x288x25xbf16> to vector<288x25xbf16>
    %cst_17 = arith.constant dense<0.000000e+00> : vector<288x128xf32>
    %26 = tpu.matmul %25, %0, %cst_17 {dimension_numbers = #tpu.dot_dimension_numbers<[1], [0], [0], [1], [0, 0, 1, 1], [], []>} : vector<288x25xbf16>, vector<25x128xbf16>, vector<288x128xf32> -> vector<288x128xf32>
    %27 = vector.broadcast %1 : vector<1x128xf32> to vector<288x128xf32>
    %28 = arith.addf %26, %27 : vector<288x128xf32>
    %cst_18 = arith.constant 0.000000e+00 : f32
    %29 = vector.broadcast %cst_18 : f32 to vector<288x128xf32>
    %30 = arith.maximumf %28, %29 : vector<288x128xf32>
    %31 = arith.maximumf %23, %30 : vector<288x128xf32>
    %32 = arith.maximumf %16, %31 : vector<288x128xf32>
    %c0_19 = arith.constant 0 : index
    %c0_20 = arith.constant 0 : index
    %33 = vector.load %arg4[%c0_19, %c0_20] : memref<288x128xf32, #tpu.memory_space<vmem>>, vector<288x128xf32>
    tpu.vector_store %arg4[%c0_19, %c0_20], %32 {strides = array<i32>} : memref<288x128xf32, #tpu.memory_space<vmem>>, vector<288x128xf32>,
    return
  }
  func.func @transform_0(%arg0: i32) -> (i32, i32, i32) {
    %c0_i32 = arith.constant 0 : i32
    %c0_i32_0 = arith.constant 0 : i32
    %c0_i32_1 = arith.constant 0 : i32
    return %c0_i32, %arg0, %c0_i32_0 : i32, i32, i32
  }
  func.func @transform_1(%arg0: i32) -> (i32, i32) {
    %c0_i32 = arith.constant 0 : i32
    %c0_i32_0 = arith.constant 0 : i32
    %c0_i32_1 = arith.constant 0 : i32
    return %c0_i32, %c0_i32_0 : i32, i32
  }
  func.func @transform_2(%arg0: i32) -> (i32, i32) {
    %c0_i32 = arith.constant 0 : i32
    %c0_i32_0 = arith.constant 0 : i32
    %c0_i32_1 = arith.constant 0 : i32
    return %c0_i32, %c0_i32_0 : i32, i32
  }
  func.func @transform_3(%arg0: i32) -> (i32, i32) {
    %c0_i32 = arith.constant 0 : i32
    %c0_i32_0 = arith.constant 0 : i32
    return %arg0, %c0_i32 : i32, i32
  }
}

module attributes {stable_mosaic.version = 11 : i64} {
  func.func @_conv_relu_pool_kernel(%arg0: i32, %arg1: memref<4x32x150xbf16, #tpu.memory_space<vmem>>, %arg2: memref<150x128xbf16, #tpu.memory_space<vmem>>, %arg3: memref<1x128xf32, #tpu.memory_space<vmem>>, %arg4: memref<32x128xf32, #tpu.memory_space<vmem>>) attributes {dimension_semantics = [#tpu.dimension_semantics<parallel>], iteration_bounds = array<i64: 1>, scalar_prefetch = 0 : i64, scratch_operands = 0 : i64, tpu.core_type = #tpu.core_type<tc>, window_params = [{transform_indices = @transform_0, window_bounds = array<i64: 4, 32, 150>}, {pipeline_mode = #tpu.pipeline_mode<synchronous>, transform_indices = @transform_1, window_bounds = array<i64: 150, 128>}, {pipeline_mode = #tpu.pipeline_mode<synchronous>, transform_indices = @transform_2, window_bounds = array<i64: 1, 128>}, {transform_indices = @transform_3, window_bounds = array<i64: 32, 128>}]} {
    %c0 = arith.constant 0 : index
    %c0_0 = arith.constant 0 : index
    %0 = vector.load %arg2[%c0, %c0_0] : memref<150x128xbf16, #tpu.memory_space<vmem>>, vector<150x128xbf16>
    %c0_1 = arith.constant 0 : index
    %c0_2 = arith.constant 0 : index
    %1 = vector.load %arg3[%c0_1, %c0_2] : memref<1x128xf32, #tpu.memory_space<vmem>>, vector<1x128xf32>
    %c0_3 = arith.constant 0 : index
    %c0_4 = arith.constant 0 : index
    %c0_5 = arith.constant 0 : index
    %2 = vector.load %arg1[%c0_3, %c0_4, %c0_5] : memref<4x32x150xbf16, #tpu.memory_space<vmem>>, vector<1x32x150xbf16>
    %3 = vector.shape_cast %2 : vector<1x32x150xbf16> to vector<32x150xbf16>
    %cst = arith.constant dense<0.000000e+00> : vector<32x128xf32>
    %4 = tpu.matmul %3, %0, %cst {dimension_numbers = #tpu.dot_dimension_numbers<[1], [0], [0], [1], [0, 0, 1, 1], [], []>} : vector<32x150xbf16>, vector<150x128xbf16>, vector<32x128xf32> -> vector<32x128xf32>
    %5 = vector.broadcast %1 : vector<1x128xf32> to vector<32x128xf32>
    %6 = arith.addf %4, %5 : vector<32x128xf32>
    %cst_6 = arith.constant 0.000000e+00 : f32
    %7 = vector.broadcast %cst_6 : f32 to vector<32x128xf32>
    %8 = arith.maximumf %6, %7 : vector<32x128xf32>
    %c1 = arith.constant 1 : index
    %c0_7 = arith.constant 0 : index
    %c0_8 = arith.constant 0 : index
    %9 = vector.load %arg1[%c1, %c0_7, %c0_8] : memref<4x32x150xbf16, #tpu.memory_space<vmem>>, vector<1x32x150xbf16>
    %10 = vector.shape_cast %9 : vector<1x32x150xbf16> to vector<32x150xbf16>
    %cst_9 = arith.constant dense<0.000000e+00> : vector<32x128xf32>
    %11 = tpu.matmul %10, %0, %cst_9 {dimension_numbers = #tpu.dot_dimension_numbers<[1], [0], [0], [1], [0, 0, 1, 1], [], []>} : vector<32x150xbf16>, vector<150x128xbf16>, vector<32x128xf32> -> vector<32x128xf32>
    %12 = vector.broadcast %1 : vector<1x128xf32> to vector<32x128xf32>
    %13 = arith.addf %11, %12 : vector<32x128xf32>
    %cst_10 = arith.constant 0.000000e+00 : f32
    %14 = vector.broadcast %cst_10 : f32 to vector<32x128xf32>
    %15 = arith.maximumf %13, %14 : vector<32x128xf32>
    %16 = arith.maximumf %8, %15 : vector<32x128xf32>
    %c2 = arith.constant 2 : index
    %c0_11 = arith.constant 0 : index
    %c0_12 = arith.constant 0 : index
    %17 = vector.load %arg1[%c2, %c0_11, %c0_12] : memref<4x32x150xbf16, #tpu.memory_space<vmem>>, vector<1x32x150xbf16>
    %18 = vector.shape_cast %17 : vector<1x32x150xbf16> to vector<32x150xbf16>
    %cst_13 = arith.constant dense<0.000000e+00> : vector<32x128xf32>
    %19 = tpu.matmul %18, %0, %cst_13 {dimension_numbers = #tpu.dot_dimension_numbers<[1], [0], [0], [1], [0, 0, 1, 1], [], []>} : vector<32x150xbf16>, vector<150x128xbf16>, vector<32x128xf32> -> vector<32x128xf32>
    %20 = vector.broadcast %1 : vector<1x128xf32> to vector<32x128xf32>
    %21 = arith.addf %19, %20 : vector<32x128xf32>
    %cst_14 = arith.constant 0.000000e+00 : f32
    %22 = vector.broadcast %cst_14 : f32 to vector<32x128xf32>
    %23 = arith.maximumf %21, %22 : vector<32x128xf32>
    %c3 = arith.constant 3 : index
    %c0_15 = arith.constant 0 : index
    %c0_16 = arith.constant 0 : index
    %24 = vector.load %arg1[%c3, %c0_15, %c0_16] : memref<4x32x150xbf16, #tpu.memory_space<vmem>>, vector<1x32x150xbf16>
    %25 = vector.shape_cast %24 : vector<1x32x150xbf16> to vector<32x150xbf16>
    %cst_17 = arith.constant dense<0.000000e+00> : vector<32x128xf32>
    %26 = tpu.matmul %25, %0, %cst_17 {dimension_numbers = #tpu.dot_dimension_numbers<[1], [0], [0], [1], [0, 0, 1, 1], [], []>} : vector<32x150xbf16>, vector<150x128xbf16>, vector<32x128xf32> -> vector<32x128xf32>
    %27 = vector.broadcast %1 : vector<1x128xf32> to vector<32x128xf32>
    %28 = arith.addf %26, %27 : vector<32x128xf32>
    %cst_18 = arith.constant 0.000000e+00 : f32
    %29 = vector.broadcast %cst_18 : f32 to vector<32x128xf32>
    %30 = arith.maximumf %28, %29 : vector<32x128xf32>
    %31 = arith.maximumf %23, %30 : vector<32x128xf32>
    %32 = arith.maximumf %16, %31 : vector<32x128xf32>
    %c0_19 = arith.constant 0 : index
    %c0_20 = arith.constant 0 : index
    %33 = vector.load %arg4[%c0_19, %c0_20] : memref<32x128xf32, #tpu.memory_space<vmem>>, vector<32x128xf32>
    tpu.vector_store %arg4[%c0_19, %c0_20], %32 {strides = array<i32>} : memref<32x128xf32, #tpu.memory_space<vmem>>, vector<32x128xf32>,
    return
  }
  func.func @transform_0(%arg0: i32) -> (i32, i32, i32) {
    %c0_i32 = arith.constant 0 : i32
    %c0_i32_0 = arith.constant 0 : i32
    %c0_i32_1 = arith.constant 0 : i32
    return %c0_i32, %arg0, %c0_i32_0 : i32, i32, i32
  }
  func.func @transform_1(%arg0: i32) -> (i32, i32) {
    %c0_i32 = arith.constant 0 : i32
    %c0_i32_0 = arith.constant 0 : i32
    %c0_i32_1 = arith.constant 0 : i32
    return %c0_i32, %c0_i32_0 : i32, i32
  }
  func.func @transform_2(%arg0: i32) -> (i32, i32) {
    %c0_i32 = arith.constant 0 : i32
    %c0_i32_0 = arith.constant 0 : i32
    %c0_i32_1 = arith.constant 0 : i32
    return %c0_i32, %c0_i32_0 : i32, i32
  }
  func.func @transform_3(%arg0: i32) -> (i32, i32) {
    %c0_i32 = arith.constant 0 : i32
    %c0_i32_0 = arith.constant 0 : i32
    return %arg0, %c0_i32 : i32, i32
  }
}

module attributes {stable_mosaic.version = 11 : i64} {
  func.func @_fc_stack_kernel(%arg0: i32, %arg1: memref<2x256xf32, #tpu.memory_space<vmem>>, %arg2: memref<256x128xf32, #tpu.memory_space<vmem>>, %arg3: memref<1x128xf32, #tpu.memory_space<vmem>>, %arg4: memref<128x128xf32, #tpu.memory_space<vmem>>, %arg5: memref<1x128xf32, #tpu.memory_space<vmem>>, %arg6: memref<128x128xf32, #tpu.memory_space<vmem>>, %arg7: memref<1x128xf32, #tpu.memory_space<vmem>>, %arg8: memref<2x128xf32, #tpu.memory_space<vmem>>) attributes {dimension_semantics = [#tpu.dimension_semantics<parallel>], iteration_bounds = array<i64: 1>, scalar_prefetch = 0 : i64, scratch_operands = 0 : i64, tpu.core_type = #tpu.core_type<tc>, window_params = [{transform_indices = @transform_0, window_bounds = array<i64: 2, 256>}, {pipeline_mode = #tpu.pipeline_mode<synchronous>, transform_indices = @transform_1, window_bounds = array<i64: 256, 128>}, {pipeline_mode = #tpu.pipeline_mode<synchronous>, transform_indices = @transform_2, window_bounds = array<i64: 1, 128>}, {pipeline_mode = #tpu.pipeline_mode<synchronous>, transform_indices = @transform_3, window_bounds = array<i64: 128, 128>}, {pipeline_mode = #tpu.pipeline_mode<synchronous>, transform_indices = @transform_4, window_bounds = array<i64: 1, 128>}, {pipeline_mode = #tpu.pipeline_mode<synchronous>, transform_indices = @transform_5, window_bounds = array<i64: 128, 128>}, {pipeline_mode = #tpu.pipeline_mode<synchronous>, transform_indices = @transform_6, window_bounds = array<i64: 1, 128>}, {transform_indices = @transform_7, window_bounds = array<i64: 2, 128>}]} {
    %c0 = arith.constant 0 : index
    %c0_0 = arith.constant 0 : index
    %0 = vector.load %arg1[%c0, %c0_0] : memref<2x256xf32, #tpu.memory_space<vmem>>, vector<2x256xf32>
    %c0_1 = arith.constant 0 : index
    %c0_2 = arith.constant 0 : index
    %1 = vector.load %arg2[%c0_1, %c0_2] : memref<256x128xf32, #tpu.memory_space<vmem>>, vector<256x128xf32>
    %cst = arith.constant dense<0.000000e+00> : vector<2x128xf32>
    %2 = tpu.matmul %0, %1, %cst {dimension_numbers = #tpu.dot_dimension_numbers<[1], [0], [0], [1], [0, 0, 1, 1], [], []>} : vector<2x256xf32>, vector<256x128xf32>, vector<2x128xf32> -> vector<2x128xf32>
    %c0_3 = arith.constant 0 : index
    %c0_4 = arith.constant 0 : index
    %3 = vector.load %arg3[%c0_3, %c0_4] : memref<1x128xf32, #tpu.memory_space<vmem>>, vector<1x128xf32>
    %4 = vector.broadcast %3 : vector<1x128xf32> to vector<2x128xf32>
    %5 = arith.addf %2, %4 : vector<2x128xf32>
    %cst_5 = arith.constant 0.000000e+00 : f32
    %6 = vector.broadcast %cst_5 : f32 to vector<2x128xf32>
    %7 = arith.maximumf %5, %6 : vector<2x128xf32>
    %c0_6 = arith.constant 0 : index
    %c0_7 = arith.constant 0 : index
    %8 = vector.load %arg4[%c0_6, %c0_7] : memref<128x128xf32, #tpu.memory_space<vmem>>, vector<128x128xf32>
    %cst_8 = arith.constant dense<0.000000e+00> : vector<2x128xf32>
    %9 = tpu.matmul %7, %8, %cst_8 {dimension_numbers = #tpu.dot_dimension_numbers<[1], [0], [0], [1], [0, 0, 1, 1], [], []>} : vector<2x128xf32>, vector<128x128xf32>, vector<2x128xf32> -> vector<2x128xf32>
    %c0_9 = arith.constant 0 : index
    %c0_10 = arith.constant 0 : index
    %10 = vector.load %arg5[%c0_9, %c0_10] : memref<1x128xf32, #tpu.memory_space<vmem>>, vector<1x128xf32>
    %11 = vector.broadcast %10 : vector<1x128xf32> to vector<2x128xf32>
    %12 = arith.addf %9, %11 : vector<2x128xf32>
    %cst_11 = arith.constant 0.000000e+00 : f32
    %13 = vector.broadcast %cst_11 : f32 to vector<2x128xf32>
    %14 = arith.maximumf %12, %13 : vector<2x128xf32>
    %c0_12 = arith.constant 0 : index
    %c0_13 = arith.constant 0 : index
    %15 = vector.load %arg6[%c0_12, %c0_13] : memref<128x128xf32, #tpu.memory_space<vmem>>, vector<128x128xf32>
    %cst_14 = arith.constant dense<0.000000e+00> : vector<2x128xf32>
    %16 = tpu.matmul %14, %15, %cst_14 {dimension_numbers = #tpu.dot_dimension_numbers<[1], [0], [0], [1], [0, 0, 1, 1], [], []>} : vector<2x128xf32>, vector<128x128xf32>, vector<2x128xf32> -> vector<2x128xf32>
    %c0_15 = arith.constant 0 : index
    %c0_16 = arith.constant 0 : index
    %17 = vector.load %arg7[%c0_15, %c0_16] : memref<1x128xf32, #tpu.memory_space<vmem>>, vector<1x128xf32>
    %18 = vector.broadcast %17 : vector<1x128xf32> to vector<2x128xf32>
    %19 = arith.addf %16, %18 : vector<2x128xf32>
    %cst_17 = arith.constant 0.000000e+00 : f32
    %20 = vector.broadcast %cst_17 : f32 to vector<2x128xf32>
    %21 = arith.maximumf %19, %20 : vector<2x128xf32>
    %22 = tpu.iota {dimensions = array<i32: 1>} : vector<2x128xi32>
    %c10_i32 = arith.constant 10 : i32
    %23 = vector.broadcast %c10_i32 : i32 to vector<2x128xi32>
    %24 = arith.cmpi slt, %22, %23 : vector<2x128xi32>
    %cst_18 = arith.constant -1.000000e+30 : f32
    %25 = vector.broadcast %cst_18 : f32 to vector<2x128xf32>
    %26 = arith.select %24, %21, %25 : vector<2x128xi1>, vector<2x128xf32>
    %cst_19 = arith.constant dense<0xFF800000> : vector<2xf32>
    %27 = vector.multi_reduction <maximumf>, %26, %cst_19 [1] : vector<2x128xf32> to vector<2xf32>
    %28 = vector.shape_cast %27 : vector<2xf32> to vector<2x1xf32>
    %29 = vector.broadcast %28 : vector<2x1xf32> to vector<2x128xf32>
    %30 = arith.subf %26, %29 : vector<2x128xf32>
    %31 = math.exp %30 : vector<2x128xf32>
    %cst_20 = arith.constant dense<0.000000e+00> : vector<2xf32>
    %32 = vector.multi_reduction <add>, %31, %cst_20 [1] : vector<2x128xf32> to vector<2xf32>
    %33 = vector.shape_cast %32 : vector<2xf32> to vector<2x1xf32>
    %34 = math.log %33 : vector<2x1xf32>
    %35 = vector.broadcast %34 : vector<2x1xf32> to vector<2x128xf32>
    %36 = arith.subf %30, %35 : vector<2x128xf32>
    %c0_21 = arith.constant 0 : index
    %c0_22 = arith.constant 0 : index
    %37 = vector.load %arg8[%c0_21, %c0_22] : memref<2x128xf32, #tpu.memory_space<vmem>>, vector<2x128xf32>
    tpu.vector_store %arg8[%c0_21, %c0_22], %36 {strides = array<i32>} : memref<2x128xf32, #tpu.memory_space<vmem>>, vector<2x128xf32>,
    return
  }
  func.func @transform_0(%arg0: i32) -> (i32, i32) {
    %c0_i32 = arith.constant 0 : i32
    %c0_i32_0 = arith.constant 0 : i32
    return %arg0, %c0_i32 : i32, i32
  }
  func.func @transform_1(%arg0: i32) -> (i32, i32) {
    %c0_i32 = arith.constant 0 : i32
    %c0_i32_0 = arith.constant 0 : i32
    %c0_i32_1 = arith.constant 0 : i32
    return %c0_i32, %c0_i32_0 : i32, i32
  }
  func.func @transform_2(%arg0: i32) -> (i32, i32) {
    %c0_i32 = arith.constant 0 : i32
    %c0_i32_0 = arith.constant 0 : i32
    %c0_i32_1 = arith.constant 0 : i32
    return %c0_i32, %c0_i32_0 : i32, i32
  }
  func.func @transform_3(%arg0: i32) -> (i32, i32) {
    %c0_i32 = arith.constant 0 : i32
    %c0_i32_0 = arith.constant 0 : i32
    %c0_i32_1 = arith.constant 0 : i32
    return %c0_i32, %c0_i32_0 : i32, i32
  }
  func.func @transform_4(%arg0: i32) -> (i32, i32) {
    %c0_i32 = arith.constant 0 : i32
    %c0_i32_0 = arith.constant 0 : i32
    %c0_i32_1 = arith.constant 0 : i32
    return %c0_i32, %c0_i32_0 : i32, i32
  }
  func.func @transform_5(%arg0: i32) -> (i32, i32) {
    %c0_i32 = arith.constant 0 : i32
    %c0_i32_0 = arith.constant 0 : i32
    %c0_i32_1 = arith.constant 0 : i32
    return %c0_i32, %c0_i32_0 : i32, i32
  }
  func.func @transform_6(%arg0: i32) -> (i32, i32) {
    %c0_i32 = arith.constant 0 : i32
    %c0_i32_0 = arith.constant 0 : i32
    %c0_i32_1 = arith.constant 0 : i32
    return %c0_i32, %c0_i32_0 : i32, i32
  }
  func.func @transform_7(%arg0: i32) -> (i32, i32) {
    %c0_i32 = arith.constant 0 : i32
    %c0_i32_0 = arith.constant 0 : i32
    return %arg0, %c0_i32 : i32, i32
  }
}

</mosaic_0001>

<llo_original>
// kernel: convnet_forward.3
$region0: #{convnet_forward.3}
  #allocation0 [shape = 'u32[]', space=smem, size = 0x4, offset = 0x4, fixed_abs, tag = 'smem constant byte address 0x4 - core index']
  #allocation1 [shape = 'u32[144,128]{1,0:T(1,128)}', space=vmem, size = 0x12000, scoped, tag = 'internal scratch']
  %s0 = inlined_call_operand.vmem [shape: bf16[4,288,25], index: 0, kind: input, shape index: {}]
  %s1 = inlined_call_operand.vmem [shape: bf16[25,128], index: 1, kind: input, shape index: {}]
  %s2 = inlined_call_operand.vmem [shape: f32[1,128], index: 2, kind: input, shape index: {}]
  %s3 = inlined_call_operand.vmem [shape: f32[288,128], index: 3, kind: output, shape index: {}]
  %s4 = sld [smem:[#allocation0]]
  $region22: #{convnet_forward.3} parent=0
    _
  %s6 = ssub.s32 1, %s4
  %s7 = scalar_select 0, %s6, %s4
  // Predicated region
  $region2: #{convnet_forward.3} parent=0 // pred_check
    _
  $region3: #{convnet_forward.3} parent=0 // pred_check_branch
    %9 = sbr.rel (0) target = $region5
  $region4: #{convnet_forward.3} parent=0 // pred_region
    _
  $region5: #{convnet_forward.3} parent=0 // pred_fallthru
    _
  // Predicated region
  $region6: #{convnet_forward.3} parent=0 // pred_check
    _
  $region7: #{convnet_forward.3} parent=0 // pred_check_branch
    %11 = sbr.rel (0) target = $region9
  $region8: #{convnet_forward.3} parent=0 // pred_region
    _
  $region9: #{convnet_forward.3} parent=0 // pred_fallthru
    _
  // Predicated region
  $region10: #{convnet_forward.3} parent=0 // pred_check
    _
  $region11: #{convnet_forward.3} parent=0 // pred_check_branch
    %13 = sbr.rel (0) target = $region13
  $region12: #{convnet_forward.3} parent=0 // pred_region
    _
  $region13: #{convnet_forward.3} parent=0 // pred_fallthru
    _
  %v15 = vld [vmem:[%s1] sm:$0xf]
  %v16 = vld [vmem:[%s1 + $0x4] sm:$0xf]
  %v17 = vld [vmem:[%s1 + $0x8] sm:$0xf]
  %v18 = vld [vmem:[%s1 + $0xc] sm:$0x1]
  %v19 = vld [vmem:[%s2] sm:$0x1]
  %v20 = vld [vmem:[%s0] sm:$0xf]
  %v21 = vld [vmem:[%s0 + $0x4] sm:$0xf]
  %v22 = vld [vmem:[%s0 + $0x8] sm:$0xf]
  %v23 = vld [vmem:[%s0 + $0xc] sm:$0xf]
  %v24 = vld [vmem:[%s0 + $0x10] sm:$0xf]
  %v25 = vld [vmem:[%s0 + $0x14] sm:$0xf]
  %v26 = vld [vmem:[%s0 + $0x18] sm:$0xf]
  %v27 = vld [vmem:[%s0 + $0x1c] sm:$0xf]
  %v28 = vld [vmem:[%s0 + $0x20] sm:$0xf]
  %v29 = vld [vmem:[%s0 + $0x24] sm:$0xf]
  %v30 = vld [vmem:[%s0 + $0x28] sm:$0xf]
  %v31 = vld [vmem:[%s0 + $0x2c] sm:$0xf]
  %v32 = vld [vmem:[%s0 + $0x30] sm:$0xf]
  %v33 = vld [vmem:[%s0 + $0x34] sm:$0xf]
  %v34 = vld [vmem:[%s0 + $0x38] sm:$0xf]
  %v35 = vld [vmem:[%s0 + $0x3c] sm:$0xf]
  %v36 = vld [vmem:[%s0 + $0x40] sm:$0xf]
  %v37 = vld [vmem:[%s0 + $0x44] sm:$0xf]
  %v38 = vld [vmem:[%s0 + $0x48] sm:$0xf]
  %v39 = vld [vmem:[%s0 + $0x4c] sm:$0xf]
  %v40 = vld [vmem:[%s0 + $0x50] sm:$0xf]
  %v41 = vld [vmem:[%s0 + $0x54] sm:$0xf]
  %v42 = vld [vmem:[%s0 + $0x58] sm:$0xf]
  %v43 = vld [vmem:[%s0 + $0x5c] sm:$0xf]
  %v44 = vld [vmem:[%s0 + $0x60] sm:$0xf]
  %v45 = vld [vmem:[%s0 + $0x64] sm:$0xf]
  %v46 = vld [vmem:[%s0 + $0x68] sm:$0xf]
  %v47 = vld [vmem:[%s0 + $0x6c] sm:$0xf]
  %v48 = vld [vmem:[%s0 + $0x70] sm:$0xf]
  %v49 = vld [vmem:[%s0 + $0x74] sm:$0xf]
  %v50 = vld [vmem:[%s0 + $0x78] sm:$0xf]
  %v51 = vld [vmem:[%s0 + $0x7c] sm:$0xf]
  %v52 = vld [vmem:[%s0 + $0x80] sm:$0xf]
  %v53 = vld [vmem:[%s0 + $0x84] sm:$0xf]
  %v54 = vld [vmem:[%s0 + $0x88] sm:$0xf]
  %v55 = vld [vmem:[%s0 + $0x8c] sm:$0xf]
  %v57 = vlaneseq
  %v58 = vshrl.u32 %v57, 7
  %v59 = vsub.s32 0, %v58
  %v60 = vrot.slane %v19, %v59
  %v98 = vunpack.c.l.b16 %v20
  %v99 = vunpack.c.l.b16 %v21
  %v100 = vunpack.c.l.b16 %v22
  %v101 = vunpack.c.l.b16 %v23
  %v102 = vunpack.c.l.b16 %v24
  %v103 = vunpack.c.l.b16 %v25
  %v104 = vunpack.c.l.b16 %v26
  %v105 = vunpack.c.l.b16 %v27
  %v106 = vunpack.c.l.b16 %v28
  %v107 = vunpack.c.l.b16 %v29
  %v108 = vunpack.c.l.b16 %v30
  %v109 = vunpack.c.l.b16 %v31
  %v110 = vunpack.c.l.b16 %v32
  %v111 = vunpack.c.l.b16 %v33
  %v112 = vunpack.c.l.b16 %v34
  %v113 = vunpack.c.l.b16 %v35
  %v114 = vunpack.c.l.b16 %v36
  %v115 = vunpack.c.l.b16 %v37
  %v116 = vunpack.c.l.b16 %v38
  %v117 = vunpack.c.l.b16 %v39
  %v118 = vunpack.c.l.b16 %v40
  %v119 = vunpack.c.l.b16 %v41
  %v120 = vunpack.c.l.b16 %v42
  %v121 = vunpack.c.l.b16 %v43
  %v122 = vunpack.c.l.b16 %v44
  %v123 = vunpack.c.l.b16 %v45
  %v124 = vunpack.c.l.b16 %v46
  %v125 = vunpack.c.l.b16 %v47
  %v126 = vunpack.c.l.b16 %v48
  %v127 = vunpack.c.l.b16 %v49
  %v128 = vunpack.c.l.b16 %v50
  %v129 = vunpack.c.l.b16 %v51
  %v130 = vunpack.c.l.b16 %v52
  %v131 = vunpack.c.l.b16 %v53
  %v132 = vunpack.c.l.b16 %v54
  %v133 = vunpack.c.l.b16 %v55
  %v134 = vpack.c.b16 %v99, %v98
  %v135 = vpack.c.b16 %v101, %v100
  %v136 = vpack.c.b16 %v103, %v102
  %v137 = vpack.c.b16 %v105, %v104
  %v138 = vpack.c.b16 %v107, %v106
  %v139 = vpack.c.b16 %v109, %v108
  %v140 = vpack.c.b16 %v111, %v110
  %v141 = vpack.c.b16 %v113, %v112
  %v142 = vpack.c.b16 %v115, %v114
  %v143 = vpack.c.b16 %v117, %v116
  %v144 = vpack.c.b16 %v119, %v118
  %v145 = vpack.c.b16 %v121, %v120
  %v146 = vpack.c.b16 %v123, %v122
  %v147 = vpack.c.b16 %v125, %v124
  %v148 = vpack.c.b16 %v127, %v126
  %v149 = vpack.c.b16 %v129, %v128
  %v150 = vpack.c.b16 %v131, %v130
  %v151 = vpack.c.b16 %v133, %v132
  %v156 = vunpack.c.l.b16 %v15
  %v157 = vunpack.c.l.b16 %v16
  %v158 = vunpack.c.l.b16 %v17
  %v159 = vunpack.c.l.b16 %v18
  %v160 = vpack.c.b16 %v157, %v156
  %v161 = vpack.c.b16 %v159, %v158
  %vm163 = vcmask 203776
  %v165 = vsel %vm163, %v134, 0
  %v168 = vsel %vm163, %v135, 0
  %v171 = vsel %vm163, %v136, 0
  %v174 = vsel %vm163, %v137, 0
  %v177 = vsel %vm163, %v138, 0
  %v180 = vsel %vm163, %v139, 0
  %v183 = vsel %vm163, %v140, 0
  %v186 = vsel %vm163, %v141, 0
  %v189 = vsel %vm163, %v142, 0
  %v192 = vsel %vm163, %v143, 0
  %v195 = vsel %vm163, %v144, 0
  %v198 = vsel %vm163, %v145, 0
  %v201 = vsel %vm163, %v146, 0
  %v204 = vsel %vm163, %v147, 0
  %v207 = vsel %vm163, %v148, 0
  %v210 = vsel %vm163, %v149, 0
  %v213 = vsel %vm163, %v150, 0
  %v216 = vsel %vm163, %v151, 0
  %vm218 = vcmask 1043456
  %vm219 = vcmask 1044480
  %v220 = vsel %vm218, 4294967295, 65535
  %v221 = vsel %vm219, %v220, 0
  %v223 = vand.u32 %v161, %v221
  %225 = vmatprep.subr.bf16.mxu0 0
  %226 = vmatpush1.bf16.msra.mxu0 0
  %227 = vmatprep.subr.bf16.mxu0 0
  %228 = vmatpush1.bf16.msra.mxu0 0
  %229 = vmatprep.subr.bf16.mxu0 0
  %230 = vmatpush1.bf16.msra.mxu0 0
  %231 = vmatprep.subr.bf16.mxu0 0
  %232 = vmatpush1.bf16.msra.mxu0 0
  %233 = vmatprep.subr.bf16.mxu0 0
  %234 = vmatpush1.bf16.msra.mxu0 0
  %235 = vmatprep.subr.bf16.mxu0 0
  %236 = vmatpush1.bf16.msra.mxu0 0
  %237 = vmatprep.subr.bf16.mxu0 0
  %238 = vmatpush1.bf16.msra.mxu0 %v223
  %239 = vmatprep.subr.bf16.mxu0 0
  %240 = vmatpush1.bf16.msra.mxu0 %v160
  %241 = vmatprep.subr.bf16.mxu0 0
  %242 = vmatpush2.bf16.msra.mxu0 0
  %243 = vmatprep.subr.bf16.mxu0 0
  %244 = vmatpush2.bf16.msra.mxu0 0
  %245 = vmatprep.subr.bf16.mxu0 0
  %246 = vmatpush2.bf16.msra.mxu0 0
  %247 = vmatprep.subr.bf16.mxu0 0
  %248 = vmatpush2.bf16.msra.mxu0 0
  %249 = vmatprep.subr.bf16.mxu0 0
  %250 = vmatpush2.bf16.msra.mxu0 0
  %251 = vmatprep.subr.bf16.mxu0 0
  %252 = vmatpush2.bf16.msra.mxu0 0
  %253 = vmatprep.subr.bf16.mxu0 0
  %254 = vmatpush2.bf16.msra.mxu0 0
  %255 = vmatprep.subr.bf16.mxu0 0
  %256 = vmatpush2.bf16.msra.mxu0 0
  %257 = vmatprep.mubr.bf16.mxu0 0
  %258 = vmatmul.mubr.bf16.gmra.mxu0 %v165
  %v259 = vpop.f32.mrf.mxu0
  %v260 = vadd.f32 %v60, %v259
  %v261 = vpop.f32.mrf.mxu0
  %v262 = vpop.f32.mrf.mxu0
  %v263 = vadd.f32 %v60, %v262
  %v264 = vpop.f32.mrf.mxu0
  %265 = vmatprep.mubr.bf16.mxu0 0
  %266 = vmatmul.mubr.bf16.gmra.mxu0 %v168
  %v267 = vpop.f32.mrf.mxu0
  %v268 = vadd.f32 %v60, %v267
  %v269 = vpop.f32.mrf.mxu0
  %v270 = vpop.f32.mrf.mxu0
  %v271 = vadd.f32 %v60, %v270
  %v272 = vpop.f32.mrf.mxu0
  %273 = vmatprep.mubr.bf16.mxu0 0
  %274 = vmatmul.mubr.bf16.gmra.mxu0 %v171
  %v275 = vpop.f32.mrf.mxu0
  %v276 = vadd.f32 %v60, %v275
  %v277 = vpop.f32.mrf.mxu0
  %v278 = vpop.f32.mrf.mxu0
  %v279 = vadd.f32 %v60, %v278
  %v280 = vpop.f32.mrf.mxu0
  %281 = vmatprep.mubr.bf16.mxu0 0
  %282 = vmatmul.mubr.bf16.gmra.mxu0 %v174
  %v283 = vpop.f32.mrf.mxu0
  %v284 = vadd.f32 %v60, %v283
  %v285 = vpop.f32.mrf.mxu0
  %v286 = vpop.f32.mrf.mxu0
  %v287 = vadd.f32 %v60, %v286
  %v288 = vpop.f32.mrf.mxu0
  %289 = vmatprep.mubr.bf16.mxu0 0
  %290 = vmatmul.mubr.bf16.gmra.mxu0 %v177
  %v291 = vpop.f32.mrf.mxu0
  %v292 = vadd.f32 %v60, %v291
  %v293 = vpop.f32.mrf.mxu0
  %v294 = vpop.f32.mrf.mxu0
  %v295 = vadd.f32 %v60, %v294
  %v296 = vpop.f32.mrf.mxu0
  %297 = vmatprep.mubr.bf16.mxu0 0
  %298 = vmatmul.mubr.bf16.gmra.mxu0 %v180
  %v299 = vpop.f32.mrf.mxu0
  %v300 = vadd.f32 %v60, %v299
  %v301 = vpop.f32.mrf.mxu0
  %v302 = vpop.f32.mrf.mxu0
  %v303 = vadd.f32 %v60, %v302
  %v304 = vpop.f32.mrf.mxu0
  %305 = vmatprep.mubr.bf16.mxu0 0
  %306 = vmatmul.mubr.bf16.gmra.mxu0 %v183
  %v307 = vpop.f32.mrf.mxu0
  %v308 = vadd.f32 %v60, %v307
  %v309 = vpop.f32.mrf.mxu0
  %v310 = vpop.f32.mrf.mxu0
  %v311 = vadd.f32 %v60, %v310
  %v312 = vpop.f32.mrf.mxu0
  %313 = vmatprep.mubr.bf16.mxu0 0
  %314 = vmatmul.mubr.bf16.gmra.mxu0 %v186
  %v315 = vpop.f32.mrf.mxu0
  %v316 = vadd.f32 %v60, %v315
  %v317 = vpop.f32.mrf.mxu0
  %v318 = vpop.f32.mrf.mxu0
  %v319 = vadd.f32 %v60, %v318
  %v320 = vpop.f32.mrf.mxu0
  %321 = vmatprep.mubr.bf16.mxu0 0
  %322 = vmatmul.mubr.bf16.gmra.mxu0 %v189
  %v323 = vpop.f32.mrf.mxu0
  %v324 = vadd.f32 %v60, %v323
  %v325 = vpop.f32.mrf.mxu0
  %v326 = vpop.f32.mrf.mxu0
  %v327 = vadd.f32 %v60, %v326
  %v328 = vpop.f32.mrf.mxu0
  %329 = vmatprep.mubr.bf16.mxu0 0
  %330 = vmatmul.mubr.bf16.gmra.mxu0 %v192
  %v331 = vpop.f32.mrf.mxu0
  %v332 = vadd.f32 %v60, %v331
  %v333 = vpop.f32.mrf.mxu0
  %v334 = vpop.f32.mrf.mxu0
  %v335 = vadd.f32 %v60, %v334
  %v336 = vpop.f32.mrf.mxu0
  %337 = vmatprep.mubr.bf16.mxu0 0
  %338 = vmatmul.mubr.bf16.gmra.mxu0 %v195
  %v339 = vpop.f32.mrf.mxu0
  %v340 = vadd.f32 %v60, %v339
  %v341 = vpop.f32.mrf.mxu0
  %v342 = vpop.f32.mrf.mxu0
  %v343 = vadd.f32 %v60, %v342
  %v344 = vpop.f32.mrf.mxu0
  %345 = vmatprep.mubr.bf16.mxu0 0
  %346 = vmatmul.mubr.bf16.gmra.mxu0 %v198
  %v347 = vpop.f32.mrf.mxu0
  %v348 = vadd.f32 %v60, %v347
  %v349 = vpop.f32.mrf.mxu0
  %v350 = vpop.f32.mrf.mxu0
  %v351 = vadd.f32 %v60, %v350
  %v352 = vpop.f32.mrf.mxu0
  %353 = vmatprep.mubr.bf16.mxu0 0
  %354 = vmatmul.mubr.bf16.gmra.mxu0 %v201
  %v355 = vpop.f32.mrf.mxu0
  %v356 = vadd.f32 %v60, %v355
  %v357 = vpop.f32.mrf.mxu0
  %v358 = vpop.f32.mrf.mxu0
  %v359 = vadd.f32 %v60, %v358
  %v360 = vpop.f32.mrf.mxu0
  %361 = vmatprep.mubr.bf16.mxu0 0
  %362 = vmatmul.mubr.bf16.gmra.mxu0 %v204
  %v363 = vpop.f32.mrf.mxu0
  %v364 = vadd.f32 %v60, %v363
  %v365 = vpop.f32.mrf.mxu0
  %v366 = vpop.f32.mrf.mxu0
  %v367 = vadd.f32 %v60, %v366
  %v368 = vpop.f32.mrf.mxu0
  %369 = vmatprep.mubr.bf16.mxu0 0
  %370 = vmatmul.mubr.bf16.gmra.mxu0 %v207
  %v371 = vpop.f32.mrf.mxu0
  %v372 = vadd.f32 %v60, %v371
  %v373 = vpop.f32.mrf.mxu0
  %v374 = vpop.f32.mrf.mxu0
  %v375 = vadd.f32 %v60, %v374
  %v376 = vpop.f32.mrf.mxu0
  %377 = vmatprep.mubr.bf16.mxu0 0
  %378 = vmatmul.mubr.bf16.gmra.mxu0 %v210
  %v379 = vpop.f32.mrf.mxu0
  %v380 = vadd.f32 %v60, %v379
  %v381 = vpop.f32.mrf.mxu0
  %v382 = vpop.f32.mrf.mxu0
  %v383 = vadd.f32 %v60, %v382
  %v384 = vpop.f32.mrf.mxu0
  %385 = vmatprep.mubr.bf16.mxu0 0
  %386 = vmatmul.mubr.bf16.gmra.mxu0 %v213
  %v387 = vpop.f32.mrf.mxu0
  %v388 = vadd.f32 %v60, %v387
  %v389 = vpop.f32.mrf.mxu0
  %v390 = vpop.f32.mrf.mxu0
  %v391 = vadd.f32 %v60, %v390
  %v392 = vpop.f32.mrf.mxu0
  %393 = vmatprep.mubr.bf16.mxu0 0
  %394 = vmatmul.mubr.bf16.gmra.mxu0 %v216
  %v395 = vpop.f32.mrf.mxu0
  %v396 = vadd.f32 %v60, %v395
  %v397 = vpop.f32.mrf.mxu0
  %v398 = vpop.f32.mrf.mxu0
  %v399 = vadd.f32 %v60, %v398
  %v400 = vpop.f32.mrf.mxu0
  %401 = vdwg.mxu0
  %v402 = vmax.f32 %v260, 0.0
  %v403 = vmax.f32 %v263, 0.0
  %v404 = vmax.f32 %v268, 0.0
  %v405 = vmax.f32 %v271, 0.0
  %v406 = vmax.f32 %v276, 0.0
  %v407 = vmax.f32 %v279, 0.0
  %v408 = vmax.f32 %v284, 0.0
  %v409 = vmax.f32 %v287, 0.0
  %v410 = vmax.f32 %v292, 0.0
  %v411 = vmax.f32 %v295, 0.0
  %v412 = vmax.f32 %v300, 0.0
  %v413 = vmax.f32 %v303, 0.0
  %v414 = vmax.f32 %v308, 0.0
  %v415 = vmax.f32 %v311, 0.0
  %v416 = vmax.f32 %v316, 0.0
  %v417 = vmax.f32 %v319, 0.0
  %v418 = vmax.f32 %v324, 0.0
  %v419 = vmax.f32 %v327, 0.0
  %v420 = vmax.f32 %v332, 0.0
  %v421 = vmax.f32 %v335, 0.0
  %v422 = vmax.f32 %v340, 0.0
  %v423 = vmax.f32 %v343, 0.0
  %v424 = vmax.f32 %v348, 0.0
  %v425 = vmax.f32 %v351, 0.0
  %v426 = vmax.f32 %v356, 0.0
  %v427 = vmax.f32 %v359, 0.0
  %v428 = vmax.f32 %v364, 0.0
  %v429 = vmax.f32 %v367, 0.0
  %v430 = vmax.f32 %v372, 0.0
  %v431 = vmax.f32 %v375, 0.0
  %v432 = vmax.f32 %v380, 0.0
  %v433 = vmax.f32 %v383, 0.0
  %v434 = vmax.f32 %v388, 0.0
  %v435 = vmax.f32 %v391, 0.0
  %v436 = vmax.f32 %v396, 0.0
  %v437 = vmax.f32 %v399, 0.0
  %s438 = scalar_lea.vmem %s0, 144
  %v439 = vld [vmem:[%s438] sm:$0xf]
  %v440 = vld [vmem:[%s438 + $0x4] sm:$0xf]
  %v441 = vld [vmem:[%s438 + $0x8] sm:$0xf]
  %v442 = vld [vmem:[%s438 + $0xc] sm:$0xf]
  %v443 = vld [vmem:[%s438 + $0x10] sm:$0xf]
  %v444 = vld [vmem:[%s438 + $0x14] sm:$0xf]
  %v445 = vld [vmem:[%s438 + $0x18] sm:$0xf]
  %v446 = vld [vmem:[%s438 + $0x1c] sm:$0xf]
  %v447 = vld [vmem:[%s438 + $0x20] sm:$0xf]
  %v448 = vld [vmem:[%s438 + $0x24] sm:$0xf]
  %v449 = vld [vmem:[%s438 + $0x28] sm:$0xf]
  %v450 = vld [vmem:[%s438 + $0x2c] sm:$0xf]
  %v451 = vld [vmem:[%s438 + $0x30] sm:$0xf]
  %v452 = vld [vmem:[%s438 + $0x34] sm:$0xf]
  %v453 = vld [vmem:[%s438 + $0x38] sm:$0xf]
  %v454 = vld [vmem:[%s438 + $0x3c] sm:$0xf]
  %v455 = vld [vmem:[%s438 + $0x40] sm:$0xf]
  %v456 = vld [vmem:[%s438 + $0x44] sm:$0xf]
  %v457 = vld [vmem:[%s438 + $0x48] sm:$0xf]
  %v458 = vld [vmem:[%s438 + $0x4c] sm:$0xf]
  %v459 = vld [vmem:[%s438 + $0x50] sm:$0xf]
  %v460 = vld [vmem:[%s438 + $0x54] sm:$0xf]
  %v461 = vld [vmem:[%s438 + $0x58] sm:$0xf]
  %v462 = vld [vmem:[%s438 + $0x5c] sm:$0xf]
  %v463 = vld [vmem:[%s438 + $0x60] sm:$0xf]
  %v464 = vld [vmem:[%s438 + $0x64] sm:$0xf]
  %v465 = vld [vmem:[%s438 + $0x68] sm:$0xf]
  %v466 = vld [vmem:[%s438 + $0x6c] sm:$0xf]
  %v467 = vld [vmem:[%s438 + $0x70] sm:$0xf]
  %v468 = vld [vmem:[%s438 + $0x74] sm:$0xf]
  %v469 = vld [vmem:[%s438 + $0x78] sm:$0xf]
  %v470 = vld [vmem:[%s438 + $0x7c] sm:$0xf]
  %v471 = vld [vmem:[%s438 + $0x80] sm:$0xf]
  %v472 = vld [vmem:[%s438 + $0x84] sm:$0xf]
  %v473 = vld [vmem:[%s438 + $0x88] sm:$0xf]
  %v474 = vld [vmem:[%s438 + $0x8c] sm:$0xf]
  %v511 = vunpack.c.l.b16 %v439
  %v512 = vunpack.c.l.b16 %v440
  %v513 = vunpack.c.l.b16 %v441
  %v514 = vunpack.c.l.b16 %v442
  %v515 = vunpack.c.l.b16 %v443
  %v516 = vunpack.c.l.b16 %v444
  %v517 = vunpack.c.l.b16 %v445
  %v518 = vunpack.c.l.b16 %v446
  %v519 = vunpack.c.l.b16 %v447
  %v520 = vunpack.c.l.b16 %v448
  %v521 = vunpack.c.l.b16 %v449
  %v522 = vunpack.c.l.b16 %v450
  %v523 = vunpack.c.l.b16 %v451
  %v524 = vunpack.c.l.b16 %v452
  %v525 = vunpack.c.l.b16 %v453
  %v526 = vunpack.c.l.b16 %v454
  %v527 = vunpack.c.l.b16 %v455
  %v528 = vunpack.c.l.b16 %v456
  %v529 = vunpack.c.l.b16 %v457
  %v530 = vunpack.c.l.b16 %v458
  %v531 = vunpack.c.l.b16 %v459
  %v532 = vunpack.c.l.b16 %v460
  %v533 = vunpack.c.l.b16 %v461
  %v534 = vunpack.c.l.b16 %v462
  %v535 = vunpack.c.l.b16 %v463
  %v536 = vunpack.c.l.b16 %v464
  %v537 = vunpack.c.l.b16 %v465
  %v538 = vunpack.c.l.b16 %v466
  %v539 = vunpack.c.l.b16 %v467
  %v540 = vunpack.c.l.b16 %v468
  %v541 = vunpack.c.l.b16 %v469
  %v542 = vunpack.c.l.b16 %v470
  %v543 = vunpack.c.l.b16 %v471
  %v544 = vunpack.c.l.b16 %v472
  %v545 = vunpack.c.l.b16 %v473
  %v546 = vunpack.c.l.b16 %v474
  %v547 = vpack.c.b16 %v512, %v511
  %v548 = vpack.c.b16 %v514, %v513
  %v549 = vpack.c.b16 %v516, %v515
  %v550 = vpack.c.b16 %v518, %v517
  %v551 = vpack.c.b16 %v520, %v519
  %v552 = vpack.c.b16 %v522, %v521
  %v553 = vpack.c.b16 %v524, %v523
  %v554 = vpack.c.b16 %v526, %v525
  %v555 = vpack.c.b16 %v528, %v527
  %v556 = vpack.c.b16 %v530, %v529
  %v557 = vpack.c.b16 %v532, %v531
  %v558 = vpack.c.b16 %v534, %v533
  %v559 = vpack.c.b16 %v536, %v535
  %v560 = vpack.c.b16 %v538, %v537
  %v561 = vpack.c.b16 %v540, %v539
  %v562 = vpack.c.b16 %v542, %v541
  %v563 = vpack.c.b16 %v544, %v543
  %v564 = vpack.c.b16 %v546, %v545
  %v566 = vsel %vm163, %v547, 0
  %v569 = vsel %vm163, %v548, 0
  %v572 = vsel %vm163, %v549, 0
  %v575 = vsel %vm163, %v550, 0
  %v578 = vsel %vm163, %v551, 0
  %v581 = vsel %vm163, %v552, 0
  %v584 = vsel %vm163, %v553, 0
  %v587 = vsel %vm163, %v554, 0
  %v590 = vsel %vm163, %v555, 0
  %v593 = vsel %vm163, %v556, 0
  %v596 = vsel %vm163, %v557, 0
  %v599 = vsel %vm163, %v558, 0
  %v602 = vsel %vm163, %v559, 0
  %v605 = vsel %vm163, %v560, 0
  %v608 = vsel %vm163, %v561, 0
  %v611 = vsel %vm163, %v562, 0
  %v614 = vsel %vm163, %v563, 0
  %v617 = vsel %vm163, %v564, 0
  %619 = vmatprep.subr.bf16.mxu0 0
  %620 = vmatpush1.bf16.msra.mxu0 0
  %621 = vmatprep.subr.bf16.mxu0 0
  %622 = vmatpush1.bf16.msra.mxu0 0
  %623 = vmatprep.subr.bf16.mxu0 0
  %624 = vmatpush1.bf16.msra.mxu0 0
  %625 = vmatprep.subr.bf16.mxu0 0
  %626 = vmatpush1.bf16.msra.mxu0 0
  %627 = vmatprep.subr.bf16.mxu0 0
  %628 = vmatpush1.bf16.msra.mxu0 0
  %629 = vmatprep.subr.bf16.mxu0 0
  %630 = vmatpush1.bf16.msra.mxu0 0
  %631 = vmatprep.subr.bf16.mxu0 0
  %632 = vmatpush1.bf16.msra.mxu0 %v223
  %633 = vmatprep.subr.bf16.mxu0 0
  %634 = vmatpush1.bf16.msra.mxu0 %v160
  %635 = vmatprep.subr.bf16.mxu0 0
  %636 = vmatpush2.bf16.msra.mxu0 0
  %637 = vmatprep.subr.bf16.mxu0 0
  %638 = vmatpush2.bf16.msra.mxu0 0
  %639 = vmatprep.subr.bf16.mxu0 0
  %640 = vmatpush2.bf16.msra.mxu0 0
  %641 = vmatprep.subr.bf16.mxu0 0
  %642 = vmatpush2.bf16.msra.mxu0 0
  %643 = vmatprep.subr.bf16.mxu0 0
  %644 = vmatpush2.bf16.msra.mxu0 0
  %645 = vmatprep.subr.bf16.mxu0 0
  %646 = vmatpush2.bf16.msra.mxu0 0
  %647 = vmatprep.subr.bf16.mxu0 0
  %648 = vmatpush2.bf16.msra.mxu0 0
  %649 = vmatprep.subr.bf16.mxu0 0
  %650 = vmatpush2.bf16.msra.mxu0 0
  %651 = vmatprep.mubr.bf16.mxu0 0
  %652 = vmatmul.mubr.bf16.gmra.mxu0 %v566
  %v653 = vpop.f32.mrf.mxu0
  %v654 = vadd.f32 %v60, %v653
  %v655 = vpop.f32.mrf.mxu0
  %v656 = vpop.f32.mrf.mxu0
  %v657 = vadd.f32 %v60, %v656
  %v658 = vpop.f32.mrf.mxu0
  %659 = vmatprep.mubr.bf16.mxu0 0
  %660 = vmatmul.mubr.bf16.gmra.mxu0 %v569
  %v661 = vpop.f32.mrf.mxu0
  %v662 = vadd.f32 %v60, %v661
  %v663 = vpop.f32.mrf.mxu0
  %v664 = vpop.f32.mrf.mxu0
  %v665 = vadd.f32 %v60, %v664
  %v666 = vpop.f32.mrf.mxu0
  %667 = vmatprep.mubr.bf16.mxu0 0
  %668 = vmatmul.mubr.bf16.gmra.mxu0 %v572
  %v669 = vpop.f32.mrf.mxu0
  %v670 = vadd.f32 %v60, %v669
  %v671 = vpop.f32.mrf.mxu0
  %v672 = vpop.f32.mrf.mxu0
  %v673 = vadd.f32 %v60, %v672
  %v674 = vpop.f32.mrf.mxu0
  %675 = vmatprep.mubr.bf16.mxu0 0
  %676 = vmatmul.mubr.bf16.gmra.mxu0 %v575
  %v677 = vpop.f32.mrf.mxu0
  %v678 = vadd.f32 %v60, %v677
  %v679 = vpop.f32.mrf.mxu0
  %v680 = vpop.f32.mrf.mxu0
  %v681 = vadd.f32 %v60, %v680
  %v682 = vpop.f32.mrf.mxu0
  %683 = vmatprep.mubr.bf16.mxu0 0
  %684 = vmatmul.mubr.bf16.gmra.mxu0 %v578
  %v685 = vpop.f32.mrf.mxu0
  %v686 = vadd.f32 %v60, %v685
  %v687 = vpop.f32.mrf.mxu0
  %v688 = vpop.f32.mrf.mxu0
  %v689 = vadd.f32 %v60, %v688
  %v690 = vpop.f32.mrf.mxu0
  %691 = vmatprep.mubr.bf16.mxu0 0
  %692 = vmatmul.mubr.bf16.gmra.mxu0 %v581
  %v693 = vpop.f32.mrf.mxu0
  %v694 = vadd.f32 %v60, %v693
  %v695 = vpop.f32.mrf.mxu0
  %v696 = vpop.f32.mrf.mxu0
  %v697 = vadd.f32 %v60, %v696
  %v698 = vpop.f32.mrf.mxu0
  %699 = vmatprep.mubr.bf16.mxu0 0
  %700 = vmatmul.mubr.bf16.gmra.mxu0 %v584
  %v701 = vpop.f32.mrf.mxu0
  %v702 = vadd.f32 %v60, %v701
  %v703 = vpop.f32.mrf.mxu0
  %v704 = vpop.f32.mrf.mxu0
  %v705 = vadd.f32 %v60, %v704
  %v706 = vpop.f32.mrf.mxu0
  %707 = vmatprep.mubr.bf16.mxu0 0
  %708 = vmatmul.mubr.bf16.gmra.mxu0 %v587
  %v709 = vpop.f32.mrf.mxu0
  %v710 = vadd.f32 %v60, %v709
  %v711 = vpop.f32.mrf.mxu0
  %v712 = vpop.f32.mrf.mxu0
  %v713 = vadd.f32 %v60, %v712
  %v714 = vpop.f32.mrf.mxu0
  %715 = vmatprep.mubr.bf16.mxu0 0
  %716 = vmatmul.mubr.bf16.gmra.mxu0 %v590
  %v717 = vpop.f32.mrf.mxu0
  %v718 = vadd.f32 %v60, %v717
  %v719 = vpop.f32.mrf.mxu0
  %v720 = vpop.f32.mrf.mxu0
  %v721 = vadd.f32 %v60, %v720
  %v722 = vpop.f32.mrf.mxu0
  %723 = vmatprep.mubr.bf16.mxu0 0
  %724 = vmatmul.mubr.bf16.gmra.mxu0 %v593
  %v725 = vpop.f32.mrf.mxu0
  %v726 = vadd.f32 %v60, %v725
  %v727 = vpop.f32.mrf.mxu0
  %v728 = vpop.f32.mrf.mxu0
  %v729 = vadd.f32 %v60, %v728
  %v730 = vpop.f32.mrf.mxu0
  %731 = vmatprep.mubr.bf16.mxu0 0
  %732 = vmatmul.mubr.bf16.gmra.mxu0 %v596
  %v733 = vpop.f32.mrf.mxu0
  %v734 = vadd.f32 %v60, %v733
  %v735 = vpop.f32.mrf.mxu0
  %v736 = vpop.f32.mrf.mxu0
  %v737 = vadd.f32 %v60, %v736
  %v738 = vpop.f32.mrf.mxu0
  %739 = vmatprep.mubr.bf16.mxu0 0
  %740 = vmatmul.mubr.bf16.gmra.mxu0 %v599
  %v741 = vpop.f32.mrf.mxu0
  %v742 = vadd.f32 %v60, %v741
  %v743 = vpop.f32.mrf.mxu0
  %v744 = vpop.f32.mrf.mxu0
  %v745 = vadd.f32 %v60, %v744
  %v746 = vpop.f32.mrf.mxu0
  %747 = vmatprep.mubr.bf16.mxu0 0
  %748 = vmatmul.mubr.bf16.gmra.mxu0 %v602
  %v749 = vpop.f32.mrf.mxu0
  %v750 = vadd.f32 %v60, %v749
  %v751 = vpop.f32.mrf.mxu0
  %v752 = vpop.f32.mrf.mxu0
  %v753 = vadd.f32 %v60, %v752
  %v754 = vpop.f32.mrf.mxu0
  %755 = vmatprep.mubr.bf16.mxu0 0
  %756 = vmatmul.mubr.bf16.gmra.mxu0 %v605
  %v757 = vpop.f32.mrf.mxu0
  %v758 = vadd.f32 %v60, %v757
  %v759 = vpop.f32.mrf.mxu0
  %v760 = vpop.f32.mrf.mxu0
  %v761 = vadd.f32 %v60, %v760
  %v762 = vpop.f32.mrf.mxu0
  %763 = vmatprep.mubr.bf16.mxu0 0
  %764 = vmatmul.mubr.bf16.gmra.mxu0 %v608
  %v765 = vpop.f32.mrf.mxu0
  %v766 = vadd.f32 %v60, %v765
  %v767 = vpop.f32.mrf.mxu0
  %v768 = vpop.f32.mrf.mxu0
  %v769 = vadd.f32 %v60, %v768
  %v770 = vpop.f32.mrf.mxu0
  %771 = vmatprep.mubr.bf16.mxu0 0
  %772 = vmatmul.mubr.bf16.gmra.mxu0 %v611
  %v773 = vpop.f32.mrf.mxu0
  %v774 = vadd.f32 %v60, %v773
  %v775 = vpop.f32.mrf.mxu0
  %v776 = vpop.f32.mrf.mxu0
  %v777 = vadd.f32 %v60, %v776
  %v778 = vpop.f32.mrf.mxu0
  %779 = vmatprep.mubr.bf16.mxu0 0
  %780 = vmatmul.mubr.bf16.gmra.mxu0 %v614
  %v781 = vpop.f32.mrf.mxu0
  %v782 = vadd.f32 %v60, %v781
  %v783 = vpop.f32.mrf.mxu0
  %v784 = vpop.f32.mrf.mxu0
  %v785 = vadd.f32 %v60, %v784
  %v786 = vpop.f32.mrf.mxu0
  %787 = vmatprep.mubr.bf16.mxu0 0
  %788 = vmatmul.mubr.bf16.gmra.mxu0 %v617
  %v789 = vpop.f32.mrf.mxu0
  %v790 = vadd.f32 %v60, %v789
  %v791 = vpop.f32.mrf.mxu0
  %v792 = vpop.f32.mrf.mxu0
  %v793 = vadd.f32 %v60, %v792
  %v794 = vpop.f32.mrf.mxu0
  %795 = vdwg.mxu0
  %v796 = vmax.f32 %v654, 0.0
  %v797 = vmax.f32 %v657, 0.0
  %v798 = vmax.f32 %v662, 0.0
  %v799 = vmax.f32 %v665, 0.0
  %v800 = vmax.f32 %v670, 0.0
  %v801 = vmax.f32 %v673, 0.0
  %v802 = vmax.f32 %v678, 0.0
  %v803 = vmax.f32 %v681, 0.0
  %v804 = vmax.f32 %v686, 0.0
  %v805 = vmax.f32 %v689, 0.0
  %v806 = vmax.f32 %v694, 0.0
  %v807 = vmax.f32 %v697, 0.0
  %v808 = vmax.f32 %v702, 0.0
  %v809 = vmax.f32 %v705, 0.0
  %v810 = vmax.f32 %v710, 0.0
  %v811 = vmax.f32 %v713, 0.0
  %v812 = vmax.f32 %v718, 0.0
  %v813 = vmax.f32 %v721, 0.0
  %v814 = vmax.f32 %v726, 0.0
  %v815 = vmax.f32 %v729, 0.0
  %v816 = vmax.f32 %v734, 0.0
  %v817 = vmax.f32 %v737, 0.0
  %v818 = vmax.f32 %v742, 0.0
  %v819 = vmax.f32 %v745, 0.0
  %v820 = vmax.f32 %v750, 0.0
  %v821 = vmax.f32 %v753, 0.0
  %v822 = vmax.f32 %v758, 0.0
  %v823 = vmax.f32 %v761, 0.0
  %v824 = vmax.f32 %v766, 0.0
  %v825 = vmax.f32 %v769, 0.0
  %v826 = vmax.f32 %v774, 0.0
  %v827 = vmax.f32 %v777, 0.0
  %v828 = vmax.f32 %v782, 0.0
  %v829 = vmax.f32 %v785, 0.0
  %v830 = vmax.f32 %v790, 0.0
  %v831 = vmax.f32 %v793, 0.0
  %v832 = vmax.f32 %v402, %v796
  %v833 = vmax.f32 %v403, %v797
  %v834 = vmax.f32 %v404, %v798
  %v835 = vmax.f32 %v405, %v799
  %v836 = vmax.f32 %v406, %v800
  %v837 = vmax.f32 %v407, %v801
  %v838 = vmax.f32 %v408, %v802
  %v839 = vmax.f32 %v409, %v803
  %v840 = vmax.f32 %v410, %v804
  %v841 = vmax.f32 %v411, %v805
  %v842 = vmax.f32 %v412, %v806
  %v843 = vmax.f32 %v413, %v807
  %v844 = vmax.f32 %v414, %v808
  %v845 = vmax.f32 %v415, %v809
  %v846 = vmax.f32 %v416, %v810
  %v847 = vmax.f32 %v417, %v811
  %v848 = vmax.f32 %v418, %v812
  %v849 = vmax.f32 %v419, %v813
  %v850 = vmax.f32 %v420, %v814
  %v851 = vmax.f32 %v421, %v815
  %v852 = vmax.f32 %v422, %v816
  %v853 = vmax.f32 %v423, %v817
  %v854 = vmax.f32 %v424, %v818
  %v855 = vmax.f32 %v425, %v819
  %v856 = vmax.f32 %v426, %v820
  %v857 = vmax.f32 %v427, %v821
  %v858 = vmax.f32 %v428, %v822
  %v859 = vmax.f32 %v429, %v823
  %v860 = vmax.f32 %v430, %v824
  %v861 = vmax.f32 %v431, %v825
  %v862 = vmax.f32 %v432, %v826
  %v863 = vmax.f32 %v433, %v827
  %v864 = vmax.f32 %v434, %v828
  %v865 = vmax.f32 %v435, %v829
  %v866 = vmax.f32 %v436, %v830
  %v867 = vmax.f32 %v437, %v831
  %s868 = scalar_lea.vmem %s0, 288
  %v869 = vld [vmem:[%s868] sm:$0xf]
  %v870 = vld [vmem:[%s868 + $0x4] sm:$0xf]
  %v871 = vld [vmem:[%s868 + $0x8] sm:$0xf]
  %v872 = vld [vmem:[%s868 + $0xc] sm:$0xf]
  %v873 = vld [vmem:[%s868 + $0x10] sm:$0xf]
  %v874 = vld [vmem:[%s868 + $0x14] sm:$0xf]
  %v875 = vld [vmem:[%s868 + $0x18] sm:$0xf]
  %v876 = vld [vmem:[%s868 + $0x1c] sm:$0xf]
  %v877 = vld [vmem:[%s868 + $0x20] sm:$0xf]
  %v878 = vld [vmem:[%s868 + $0x24] sm:$0xf]
  %v879 = vld [vmem:[%s868 + $0x28] sm:$0xf]
  %v880 = vld [vmem:[%s868 + $0x2c] sm:$0xf]
  %v881 = vld [vmem:[%s868 + $0x30] sm:$0xf]
  %v882 = vld [vmem:[%s868 + $0x34] sm:$0xf]
  %v883 = vld [vmem:[%s868 + $0x38] sm:$0xf]
  %v884 = vld [vmem:[%s868 + $0x3c] sm:$0xf]
  %v885 = vld [vmem:[%s868 + $0x40] sm:$0xf]
  %v886 = vld [vmem:[%s868 + $0x44] sm:$0xf]
  %v887 = vld [vmem:[%s868 + $0x48] sm:$0xf]
  %v888 = vld [vmem:[%s868 + $0x4c] sm:$0xf]
  %v889 = vld [vmem:[%s868 + $0x50] sm:$0xf]
  %v890 = vld [vmem:[%s868 + $0x54] sm:$0xf]
  %v891 = vld [vmem:[%s868 + $0x58] sm:$0xf]
  %v892 = vld [vmem:[%s868 + $0x5c] sm:$0xf]
  %v893 = vld [vmem:[%s868 + $0x60] sm:$0xf]
  %v894 = vld [vmem:[%s868 + $0x64] sm:$0xf]
  %v895 = vld [vmem:[%s868 + $0x68] sm:$0xf]
  %v896 = vld [vmem:[%s868 + $0x6c] sm:$0xf]
  %v897 = vld [vmem:[%s868 + $0x70] sm:$0xf]
  %v898 = vld [vmem:[%s868 + $0x74] sm:$0xf]
  %v899 = vld [vmem:[%s868 + $0x78] sm:$0xf]
  %v900 = vld [vmem:[%s868 + $0x7c] sm:$0xf]
  %v901 = vld [vmem:[%s868 + $0x80] sm:$0xf]
  %v902 = vld [vmem:[%s868 + $0x84] sm:$0xf]
  %v903 = vld [vmem:[%s868 + $0x88] sm:$0xf]
  %v904 = vld [vmem:[%s868 + $0x8c] sm:$0xf]
  %v941 = vunpack.c.l.b16 %v869
  %v942 = vunpack.c.l.b16 %v870
  %v943 = vunpack.c.l.b16 %v871
  %v944 = vunpack.c.l.b16 %v872
  %v945 = vunpack.c.l.b16 %v873
  %v946 = vunpack.c.l.b16 %v874
  %v947 = vunpack.c.l.b16 %v875
  %v948 = vunpack.c.l.b16 %v876
  %v949 = vunpack.c.l.b16 %v877
  %v950 = vunpack.c.l.b16 %v878
  %v951 = vunpack.c.l.b16 %v879
  %v952 = vunpack.c.l.b16 %v880
  %v953 = vunpack.c.l.b16 %v881
  %v954 = vunpack.c.l.b16 %v882
  %v955 = vunpack.c.l.b16 %v883
  %v956 = vunpack.c.l.b16 %v884
  %v957 = vunpack.c.l.b16 %v885
  %v958 = vunpack.c.l.b16 %v886
  %v959 = vunpack.c.l.b16 %v887
  %v960 = vunpack.c.l.b16 %v888
  %v961 = vunpack.c.l.b16 %v889
  %v962 = vunpack.c.l.b16 %v890
  %v963 = vunpack.c.l.b16 %v891
  %v964 = vunpack.c.l.b16 %v892
  %v965 = vunpack.c.l.b16 %v893
  %v966 = vunpack.c.l.b16 %v894
  %v967 = vunpack.c.l.b16 %v895
  %v968 = vunpack.c.l.b16 %v896
  %v969 = vunpack.c.l.b16 %v897
  %v970 = vunpack.c.l.b16 %v898
  %v971 = vunpack.c.l.b16 %v899
  %v972 = vunpack.c.l.b16 %v900
  %v973 = vunpack.c.l.b16 %v901
  %v974 = vunpack.c.l.b16 %v902
  %v975 = vunpack.c.l.b16 %v903
  %v976 = vunpack.c.l.b16 %v904
  %v977 = vpack.c.b16 %v942, %v941
  %v978 = vpack.c.b16 %v944, %v943
  %v979 = vpack.c.b16 %v946, %v945
  %v980 = vpack.c.b16 %v948, %v947
  %v981 = vpack.c.b16 %v950, %v949
  %v982 = vpack.c.b16 %v952, %v951
  %v983 = vpack.c.b16 %v954, %v953
  %v984 = vpack.c.b16 %v956, %v955
  %v985 = vpack.c.b16 %v958, %v957
  %v986 = vpack.c.b16 %v960, %v959
  %v987 = vpack.c.b16 %v962, %v961
  %v988 = vpack.c.b16 %v964, %v963
  %v989 = vpack.c.b16 %v966, %v965
  %v990 = vpack.c.b16 %v968, %v967
  %v991 = vpack.c.b16 %v970, %v969
  %v992 = vpack.c.b16 %v972, %v971
  %v993 = vpack.c.b16 %v974, %v973
  %v994 = vpack.c.b16 %v976, %v975
  %v996 = vsel %vm163, %v977, 0
  %v999 = vsel %vm163, %v978, 0
  %v1002 = vsel %vm163, %v979, 0
  %v1005 = vsel %vm163, %v980, 0
  %v1008 = vsel %vm163, %v981, 0
  %v1011 = vsel %vm163, %v982, 0
  %v1014 = vsel %vm163, %v983, 0
  %v1017 = vsel %vm163, %v984, 0
  %v1020 = vsel %vm163, %v985, 0
  %v1023 = vsel %vm163, %v986, 0
  %v1026 = vsel %vm163, %v987, 0
  %v1029 = vsel %vm163, %v988, 0
  %v1032 = vsel %vm163, %v989, 0
  %v1035 = vsel %vm163, %v990, 0
  %v1038 = vsel %vm163, %v991, 0
  %v1041 = vsel %vm163, %v992, 0
  %v1044 = vsel %vm163, %v993, 0
  %v1047 = vsel %vm163, %v994, 0
  %1049 = vmatprep.subr.bf16.mxu0 0
  %1050 = vmatpush1.bf16.msra.mxu0 0
  %1051 = vmatprep.subr.bf16.mxu0 0
  %1052 = vmatpush1.bf16.msra.mxu0 0
  %1053 = vmatprep.subr.bf16.mxu0 0
  %1054 = vmatpush1.bf16.msra.mxu0 0
  %1055 = vmatprep.subr.bf16.mxu0 0
  %1056 = vmatpush1.bf16.msra.mxu0 0
  %1057 = vmatprep.subr.bf16.mxu0 0
  %1058 = vmatpush1.bf16.msra.mxu0 0
  %1059 = vmatprep.subr.bf16.mxu0 0
  %1060 = vmatpush1.bf16.msra.mxu0 0
  %1061 = vmatprep.subr.bf16.mxu0 0
  %1062 = vmatpush1.bf16.msra.mxu0 %v223
  %1063 = vmatprep.subr.bf16.mxu0 0
  %1064 = vmatpush1.bf16.msra.mxu0 %v160
  %1065 = vmatprep.subr.bf16.mxu0 0
  %1066 = vmatpush2.bf16.msra.mxu0 0
  %1067 = vmatprep.subr.bf16.mxu0 0
  %1068 = vmatpush2.bf16.msra.mxu0 0
  %1069 = vmatprep.subr.bf16.mxu0 0
  %1070 = vmatpush2.bf16.msra.mxu0 0
  %1071 = vmatprep.subr.bf16.mxu0 0
  %1072 = vmatpush2.bf16.msra.mxu0 0
  %1073 = vmatprep.subr.bf16.mxu0 0
  %1074 = vmatpush2.bf16.msra.mxu0 0
  %1075 = vmatprep.subr.bf16.mxu0 0
  %1076 = vmatpush2.bf16.msra.mxu0 0
  %1077 = vmatprep.subr.bf16.mxu0 0
  %1078 = vmatpush2.bf16.msra.mxu0 0
  %1079 = vmatprep.subr.bf16.mxu0 0
  %1080 = vmatpush2.bf16.msra.mxu0 0
  %1081 = vmatprep.mubr.bf16.mxu0 0
  %1082 = vmatmul.mubr.bf16.gmra.mxu0 %v996
  %v1083 = vpop.f32.mrf.mxu0
  %v1084 = vadd.f32 %v60, %v1083
  %v1085 = vpop.f32.mrf.mxu0
  %v1086 = vpop.f32.mrf.mxu0
  %v1087 = vadd.f32 %v60, %v1086
  %v1088 = vpop.f32.mrf.mxu0
  %1089 = vmatprep.mubr.bf16.mxu0 0
  %1090 = vmatmul.mubr.bf16.gmra.mxu0 %v999
  %v1091 = vpop.f32.mrf.mxu0
  %v1092 = vadd.f32 %v60, %v1091
  %v1093 = vpop.f32.mrf.mxu0
  %v1094 = vpop.f32.mrf.mxu0
  %v1095 = vadd.f32 %v60, %v1094
  %v1096 = vpop.f32.mrf.mxu0
  %1097 = vmatprep.mubr.bf16.mxu0 0
  %1098 = vmatmul.mubr.bf16.gmra.mxu0 %v1002
  %v1099 = vpop.f32.mrf.mxu0
  %v1100 = vadd.f32 %v60, %v1099
  %v1101 = vpop.f32.mrf.mxu0
  %v1102 = vpop.f32.mrf.mxu0
  %v1103 = vadd.f32 %v60, %v1102
  %v1104 = vpop.f32.mrf.mxu0
  %1105 = vmatprep.mubr.bf16.mxu0 0
  %1106 = vmatmul.mubr.bf16.gmra.mxu0 %v1005
  %v1107 = vpop.f32.mrf.mxu0
  %v1108 = vadd.f32 %v60, %v1107
  %v1109 = vpop.f32.mrf.mxu0
  %v1110 = vpop.f32.mrf.mxu0
  %v1111 = vadd.f32 %v60, %v1110
  %v1112 = vpop.f32.mrf.mxu0
  %1113 = vmatprep.mubr.bf16.mxu0 0
  %1114 = vmatmul.mubr.bf16.gmra.mxu0 %v1008
  %v1115 = vpop.f32.mrf.mxu0
  %v1116 = vadd.f32 %v60, %v1115
  %v1117 = vpop.f32.mrf.mxu0
  %v1118 = vpop.f32.mrf.mxu0
  %v1119 = vadd.f32 %v60, %v1118
  %v1120 = vpop.f32.mrf.mxu0
  %1121 = vmatprep.mubr.bf16.mxu0 0
  %1122 = vmatmul.mubr.bf16.gmra.mxu0 %v1011
  %v1123 = vpop.f32.mrf.mxu0
  %v1124 = vadd.f32 %v60, %v1123
  %v1125 = vpop.f32.mrf.mxu0
  %v1126 = vpop.f32.mrf.mxu0
  %v1127 = vadd.f32 %v60, %v1126
  %v1128 = vpop.f32.mrf.mxu0
  %1129 = vmatprep.mubr.bf16.mxu0 0
  %1130 = vmatmul.mubr.bf16.gmra.mxu0 %v1014
  %v1131 = vpop.f32.mrf.mxu0
  %v1132 = vadd.f32 %v60, %v1131
  %v1133 = vpop.f32.mrf.mxu0
  %v1134 = vpop.f32.mrf.mxu0
  %v1135 = vadd.f32 %v60, %v1134
  %v1136 = vpop.f32.mrf.mxu0
  %1137 = vmatprep.mubr.bf16.mxu0 0
  %1138 = vmatmul.mubr.bf16.gmra.mxu0 %v1017
  %v1139 = vpop.f32.mrf.mxu0
  %v1140 = vadd.f32 %v60, %v1139
  %v1141 = vpop.f32.mrf.mxu0
  %v1142 = vpop.f32.mrf.mxu0
  %v1143 = vadd.f32 %v60, %v1142
  %v1144 = vpop.f32.mrf.mxu0
  %1145 = vmatprep.mubr.bf16.mxu0 0
  %1146 = vmatmul.mubr.bf16.gmra.mxu0 %v1020
  %v1147 = vpop.f32.mrf.mxu0
  %v1148 = vadd.f32 %v60, %v1147
  %v1149 = vpop.f32.mrf.mxu0
  %v1150 = vpop.f32.mrf.mxu0
  %v1151 = vadd.f32 %v60, %v1150
  %v1152 = vpop.f32.mrf.mxu0
  %1153 = vmatprep.mubr.bf16.mxu0 0
  %1154 = vmatmul.mubr.bf16.gmra.mxu0 %v1023
  %v1155 = vpop.f32.mrf.mxu0
  %v1156 = vadd.f32 %v60, %v1155
  %v1157 = vpop.f32.mrf.mxu0
  %v1158 = vpop.f32.mrf.mxu0
  %v1159 = vadd.f32 %v60, %v1158
  %v1160 = vpop.f32.mrf.mxu0
  %1161 = vmatprep.mubr.bf16.mxu0 0
  %1162 = vmatmul.mubr.bf16.gmra.mxu0 %v1026
  %v1163 = vpop.f32.mrf.mxu0
  %v1164 = vadd.f32 %v60, %v1163
  %v1165 = vpop.f32.mrf.mxu0
  %v1166 = vpop.f32.mrf.mxu0
  %v1167 = vadd.f32 %v60, %v1166
  %v1168 = vpop.f32.mrf.mxu0
  %1169 = vmatprep.mubr.bf16.mxu0 0
  %1170 = vmatmul.mubr.bf16.gmra.mxu0 %v1029
  %v1171 = vpop.f32.mrf.mxu0
  %v1172 = vadd.f32 %v60, %v1171
  %v1173 = vpop.f32.mrf.mxu0
  %v1174 = vpop.f32.mrf.mxu0
  %v1175 = vadd.f32 %v60, %v1174
  %v1176 = vpop.f32.mrf.mxu0
  %1177 = vmatprep.mubr.bf16.mxu0 0
  %1178 = vmatmul.mubr.bf16.gmra.mxu0 %v1032
  %v1179 = vpop.f32.mrf.mxu0
  %v1180 = vadd.f32 %v60, %v1179
  %v1181 = vpop.f32.mrf.mxu0
  %v1182 = vpop.f32.mrf.mxu0
  %v1183 = vadd.f32 %v60, %v1182
  %v1184 = vpop.f32.mrf.mxu0
  %1185 = vmatprep.mubr.bf16.mxu0 0
  %1186 = vmatmul.mubr.bf16.gmra.mxu0 %v1035
  %v1187 = vpop.f32.mrf.mxu0
  %v1188 = vadd.f32 %v60, %v1187
  %v1189 = vpop.f32.mrf.mxu0
  %v1190 = vpop.f32.mrf.mxu0
  %v1191 = vadd.f32 %v60, %v1190
  %v1192 = vpop.f32.mrf.mxu0
  %1193 = vmatprep.mubr.bf16.mxu0 0
  %1194 = vmatmul.mubr.bf16.gmra.mxu0 %v1038
  %v1195 = vpop.f32.mrf.mxu0
  %v1196 = vadd.f32 %v60, %v1195
  %v1197 = vpop.f32.mrf.mxu0
  %v1198 = vpop.f32.mrf.mxu0
  %v1199 = vadd.f32 %v60, %v1198
  %v1200 = vpop.f32.mrf.mxu0
  %1201 = vmatprep.mubr.bf16.mxu0 0
  %1202 = vmatmul.mubr.bf16.gmra.mxu0 %v1041
  %v1203 = vpop.f32.mrf.mxu0
  %v1204 = vadd.f32 %v60, %v1203
  %v1205 = vpop.f32.mrf.mxu0
  %v1206 = vpop.f32.mrf.mxu0
  %v1207 = vadd.f32 %v60, %v1206
  %v1208 = vpop.f32.mrf.mxu0
  %1209 = vmatprep.mubr.bf16.mxu0 0
  %1210 = vmatmul.mubr.bf16.gmra.mxu0 %v1044
  %v1211 = vpop.f32.mrf.mxu0
  %v1212 = vadd.f32 %v60, %v1211
  %v1213 = vpop.f32.mrf.mxu0
  %v1214 = vpop.f32.mrf.mxu0
  %v1215 = vadd.f32 %v60, %v1214
  %v1216 = vpop.f32.mrf.mxu0
  %1217 = vmatprep.mubr.bf16.mxu0 0
  %1218 = vmatmul.mubr.bf16.gmra.mxu0 %v1047
  %v1219 = vpop.f32.mrf.mxu0
  %v1220 = vadd.f32 %v60, %v1219
  %v1221 = vpop.f32.mrf.mxu0
  %v1222 = vpop.f32.mrf.mxu0
  %v1223 = vadd.f32 %v60, %v1222
  %v1224 = vpop.f32.mrf.mxu0
  %1225 = vdwg.mxu0
  %v1226 = vmax.f32 %v1084, 0.0
  %v1227 = vmax.f32 %v1087, 0.0
  %v1228 = vmax.f32 %v1092, 0.0
  %v1229 = vmax.f32 %v1095, 0.0
  %v1230 = vmax.f32 %v1100, 0.0
  %v1231 = vmax.f32 %v1103, 0.0
  %v1232 = vmax.f32 %v1108, 0.0
  %v1233 = vmax.f32 %v1111, 0.0
  %v1234 = vmax.f32 %v1116, 0.0
  %v1235 = vmax.f32 %v1119, 0.0
  %v1236 = vmax.f32 %v1124, 0.0
  %v1237 = vmax.f32 %v1127, 0.0
  %v1238 = vmax.f32 %v1132, 0.0
  %v1239 = vmax.f32 %v1135, 0.0
  %v1240 = vmax.f32 %v1140, 0.0
  %v1241 = vmax.f32 %v1143, 0.0
  %v1242 = vmax.f32 %v1148, 0.0
  %v1243 = vmax.f32 %v1151, 0.0
  %v1244 = vmax.f32 %v1156, 0.0
  %v1245 = vmax.f32 %v1159, 0.0
  %v1246 = vmax.f32 %v1164, 0.0
  %v1247 = vmax.f32 %v1167, 0.0
  %v1248 = vmax.f32 %v1172, 0.0
  %v1249 = vmax.f32 %v1175, 0.0
  %v1250 = vmax.f32 %v1180, 0.0
  %v1251 = vmax.f32 %v1183, 0.0
  %v1252 = vmax.f32 %v1188, 0.0
  %v1253 = vmax.f32 %v1191, 0.0
  %v1254 = vmax.f32 %v1196, 0.0
  %v1255 = vmax.f32 %v1199, 0.0
  %v1256 = vmax.f32 %v1204, 0.0
  %v1257 = vmax.f32 %v1207, 0.0
  %v1258 = vmax.f32 %v1212, 0.0
  %v1259 = vmax.f32 %v1215, 0.0
  %v1260 = vmax.f32 %v1220, 0.0
  %v1261 = vmax.f32 %v1223, 0.0
  %s1262 = scalar_lea.vmem %s0, 432
  %v1263 = vld [vmem:[%s1262] sm:$0xf]
  %v1264 = vld [vmem:[%s1262 + $0x4] sm:$0xf]
  %v1265 = vld [vmem:[%s1262 + $0x8] sm:$0xf]
  %v1266 = vld [vmem:[%s1262 + $0xc] sm:$0xf]
  %v1267 = vld [vmem:[%s1262 + $0x10] sm:$0xf]
  %v1268 = vld [vmem:[%s1262 + $0x14] sm:$0xf]
  %v1269 = vld [vmem:[%s1262 + $0x18] sm:$0xf]
  %v1270 = vld [vmem:[%s1262 + $0x1c] sm:$0xf]
  %v1271 = vld [vmem:[%s1262 + $0x20] sm:$0xf]
  %v1272 = vld [vmem:[%s1262 + $0x24] sm:$0xf]
  %v1273 = vld [vmem:[%s1262 + $0x28] sm:$0xf]
  %v1274 = vld [vmem:[%s1262 + $0x2c] sm:$0xf]
  %v1275 = vld [vmem:[%s1262 + $0x30] sm:$0xf]
  %v1276 = vld [vmem:[%s1262 + $0x34] sm:$0xf]
  %v1277 = vld [vmem:[%s1262 + $0x38] sm:$0xf]
  %v1278 = vld [vmem:[%s1262 + $0x3c] sm:$0xf]
  %v1279 = vld [vmem:[%s1262 + $0x40] sm:$0xf]
  %v1280 = vld [vmem:[%s1262 + $0x44] sm:$0xf]
  %v1281 = vld [vmem:[%s1262 + $0x48] sm:$0xf]
  %v1282 = vld [vmem:[%s1262 + $0x4c] sm:$0xf]
  %v1283 = vld [vmem:[%s1262 + $0x50] sm:$0xf]
  %v1284 = vld [vmem:[%s1262 + $0x54] sm:$0xf]
  %v1285 = vld [vmem:[%s1262 + $0x58] sm:$0xf]
  %v1286 = vld [vmem:[%s1262 + $0x5c] sm:$0xf]
  %v1287 = vld [vmem:[%s1262 + $0x60] sm:$0xf]
  %v1288 = vld [vmem:[%s1262 + $0x64] sm:$0xf]
  %v1289 = vld [vmem:[%s1262 + $0x68] sm:$0xf]
  %v1290 = vld [vmem:[%s1262 + $0x6c] sm:$0xf]
  %v1291 = vld [vmem:[%s1262 + $0x70] sm:$0xf]
  %v1292 = vld [vmem:[%s1262 + $0x74] sm:$0xf]
  %v1293 = vld [vmem:[%s1262 + $0x78] sm:$0xf]
  %v1294 = vld [vmem:[%s1262 + $0x7c] sm:$0xf]
  %v1295 = vld [vmem:[%s1262 + $0x80] sm:$0xf]
  %v1296 = vld [vmem:[%s1262 + $0x84] sm:$0xf]
  %v1297 = vld [vmem:[%s1262 + $0x88] sm:$0xf]
  %v1298 = vld [vmem:[%s1262 + $0x8c] sm:$0xf]
  %v1335 = vunpack.c.l.b16 %v1263
  %v1336 = vunpack.c.l.b16 %v1264
  %v1337 = vunpack.c.l.b16 %v1265
  %v1338 = vunpack.c.l.b16 %v1266
  %v1339 = vunpack.c.l.b16 %v1267
  %v1340 = vunpack.c.l.b16 %v1268
  %v1341 = vunpack.c.l.b16 %v1269
  %v1342 = vunpack.c.l.b16 %v1270
  %v1343 = vunpack.c.l.b16 %v1271
  %v1344 = vunpack.c.l.b16 %v1272
  %v1345 = vunpack.c.l.b16 %v1273
  %v1346 = vunpack.c.l.b16 %v1274
  %v1347 = vunpack.c.l.b16 %v1275
  %v1348 = vunpack.c.l.b16 %v1276
  %v1349 = vunpack.c.l.b16 %v1277
  %v1350 = vunpack.c.l.b16 %v1278
  %v1351 = vunpack.c.l.b16 %v1279
  %v1352 = vunpack.c.l.b16 %v1280
  %v1353 = vunpack.c.l.b16 %v1281
  %v1354 = vunpack.c.l.b16 %v1282
  %v1355 = vunpack.c.l.b16 %v1283
  %v1356 = vunpack.c.l.b16 %v1284
  %v1357 = vunpack.c.l.b16 %v1285
  %v1358 = vunpack.c.l.b16 %v1286
  %v1359 = vunpack.c.l.b16 %v1287
  %v1360 = vunpack.c.l.b16 %v1288
  %v1361 = vunpack.c.l.b16 %v1289
  %v1362 = vunpack.c.l.b16 %v1290
  %v1363 = vunpack.c.l.b16 %v1291
  %v1364 = vunpack.c.l.b16 %v1292
  %v1365 = vunpack.c.l.b16 %v1293
  %v1366 = vunpack.c.l.b16 %v1294
  %v1367 = vunpack.c.l.b16 %v1295
  %v1368 = vunpack.c.l.b16 %v1296
  %v1369 = vunpack.c.l.b16 %v1297
  %v1370 = vunpack.c.l.b16 %v1298
  %v1371 = vpack.c.b16 %v1336, %v1335
  %v1372 = vpack.c.b16 %v1338, %v1337
  %v1373 = vpack.c.b16 %v1340, %v1339
  %v1374 = vpack.c.b16 %v1342, %v1341
  %v1375 = vpack.c.b16 %v1344, %v1343
  %v1376 = vpack.c.b16 %v1346, %v1345
  %v1377 = vpack.c.b16 %v1348, %v1347
  %v1378 = vpack.c.b16 %v1350, %v1349
  %v1379 = vpack.c.b16 %v1352, %v1351
  %v1380 = vpack.c.b16 %v1354, %v1353
  %v1381 = vpack.c.b16 %v1356, %v1355
  %v1382 = vpack.c.b16 %v1358, %v1357
  %v1383 = vpack.c.b16 %v1360, %v1359
  %v1384 = vpack.c.b16 %v1362, %v1361
  %v1385 = vpack.c.b16 %v1364, %v1363
  %v1386 = vpack.c.b16 %v1366, %v1365
  %v1387 = vpack.c.b16 %v1368, %v1367
  %v1388 = vpack.c.b16 %v1370, %v1369
  %v1390 = vsel %vm163, %v1371, 0
  %v1393 = vsel %vm163, %v1372, 0
  %v1396 = vsel %vm163, %v1373, 0
  %v1399 = vsel %vm163, %v1374, 0
  %v1402 = vsel %vm163, %v1375, 0
  %v1405 = vsel %vm163, %v1376, 0
  %v1408 = vsel %vm163, %v1377, 0
  %v1411 = vsel %vm163, %v1378, 0
  %v1414 = vsel %vm163, %v1379, 0
  %v1417 = vsel %vm163, %v1380, 0
  %v1420 = vsel %vm163, %v1381, 0
  %v1423 = vsel %vm163, %v1382, 0
  %v1426 = vsel %vm163, %v1383, 0
  %v1429 = vsel %vm163, %v1384, 0
  %v1432 = vsel %vm163, %v1385, 0
  %v1435 = vsel %vm163, %v1386, 0
  %v1438 = vsel %vm163, %v1387, 0
  %v1441 = vsel %vm163, %v1388, 0
  %1443 = vmatprep.subr.bf16.mxu0 0
  %1444 = vmatpush1.bf16.msra.mxu0 0
  %1445 = vmatprep.subr.bf16.mxu0 0
  %1446 = vmatpush1.bf16.msra.mxu0 0
  %1447 = vmatprep.subr.bf16.mxu0 0
  %1448 = vmatpush1.bf16.msra.mxu0 0
  %1449 = vmatprep.subr.bf16.mxu0 0
  %1450 = vmatpush1.bf16.msra.mxu0 0
  %1451 = vmatprep.subr.bf16.mxu0 0
  %1452 = vmatpush1.bf16.msra.mxu0 0
  %1453 = vmatprep.subr.bf16.mxu0 0
  %1454 = vmatpush1.bf16.msra.mxu0 0
  %1455 = vmatprep.subr.bf16.mxu0 0
  %1456 = vmatpush1.bf16.msra.mxu0 %v223
  %1457 = vmatprep.subr.bf16.mxu0 0
  %1458 = vmatpush1.bf16.msra.mxu0 %v160
  %1459 = vmatprep.subr.bf16.mxu0 0
  %1460 = vmatpush2.bf16.msra.mxu0 0
  %1461 = vmatprep.subr.bf16.mxu0 0
  %1462 = vmatpush2.bf16.msra.mxu0 0
  %1463 = vmatprep.subr.bf16.mxu0 0
  %1464 = vmatpush2.bf16.msra.mxu0 0
  %1465 = vmatprep.subr.bf16.mxu0 0
  %1466 = vmatpush2.bf16.msra.mxu0 0
  %1467 = vmatprep.subr.bf16.mxu0 0
  %1468 = vmatpush2.bf16.msra.mxu0 0
  %1469 = vmatprep.subr.bf16.mxu0 0
  %1470 = vmatpush2.bf16.msra.mxu0 0
  %1471 = vmatprep.subr.bf16.mxu0 0
  %1472 = vmatpush2.bf16.msra.mxu0 0
  %1473 = vmatprep.subr.bf16.mxu0 0
  %1474 = vmatpush2.bf16.msra.mxu0 0
  %1475 = vmatprep.mubr.bf16.mxu0 0
  %1476 = vmatmul.mubr.bf16.gmra.mxu0 %v1390
  %v1477 = vpop.f32.mrf.mxu0
  %v1478 = vadd.f32 %v60, %v1477
  %v1479 = vpop.f32.mrf.mxu0
  %v1480 = vpop.f32.mrf.mxu0
  %v1481 = vadd.f32 %v60, %v1480
  %v1482 = vpop.f32.mrf.mxu0
  %1483 = vmatprep.mubr.bf16.mxu0 0
  %1484 = vmatmul.mubr.bf16.gmra.mxu0 %v1393
  %v1485 = vpop.f32.mrf.mxu0
  %v1486 = vadd.f32 %v60, %v1485
  %v1487 = vpop.f32.mrf.mxu0
  %v1488 = vpop.f32.mrf.mxu0
  %v1489 = vadd.f32 %v60, %v1488
  %v1490 = vpop.f32.mrf.mxu0
  %1491 = vmatprep.mubr.bf16.mxu0 0
  %1492 = vmatmul.mubr.bf16.gmra.mxu0 %v1396
  %v1493 = vpop.f32.mrf.mxu0
  %v1494 = vadd.f32 %v60, %v1493
  %v1495 = vpop.f32.mrf.mxu0
  %v1496 = vpop.f32.mrf.mxu0
  %v1497 = vadd.f32 %v60, %v1496
  %v1498 = vpop.f32.mrf.mxu0
  %1499 = vmatprep.mubr.bf16.mxu0 0
  %1500 = vmatmul.mubr.bf16.gmra.mxu0 %v1399
  %v1501 = vpop.f32.mrf.mxu0
  %v1502 = vadd.f32 %v60, %v1501
  %v1503 = vpop.f32.mrf.mxu0
  %v1504 = vpop.f32.mrf.mxu0
  %v1505 = vadd.f32 %v60, %v1504
  %v1506 = vpop.f32.mrf.mxu0
  %1507 = vmatprep.mubr.bf16.mxu0 0
  %1508 = vmatmul.mubr.bf16.gmra.mxu0 %v1402
  %v1509 = vpop.f32.mrf.mxu0
  %v1510 = vadd.f32 %v60, %v1509
  %v1511 = vpop.f32.mrf.mxu0
  %v1512 = vpop.f32.mrf.mxu0
  %v1513 = vadd.f32 %v60, %v1512
  %v1514 = vpop.f32.mrf.mxu0
  %1515 = vmatprep.mubr.bf16.mxu0 0
  %1516 = vmatmul.mubr.bf16.gmra.mxu0 %v1405
  %v1517 = vpop.f32.mrf.mxu0
  %v1518 = vadd.f32 %v60, %v1517
  %v1519 = vpop.f32.mrf.mxu0
  %v1520 = vpop.f32.mrf.mxu0
  %v1521 = vadd.f32 %v60, %v1520
  %v1522 = vpop.f32.mrf.mxu0
  %1523 = vmatprep.mubr.bf16.mxu0 0
  %1524 = vmatmul.mubr.bf16.gmra.mxu0 %v1408
  %v1525 = vpop.f32.mrf.mxu0
  %v1526 = vadd.f32 %v60, %v1525
  %v1527 = vpop.f32.mrf.mxu0
  %v1528 = vpop.f32.mrf.mxu0
  %v1529 = vadd.f32 %v60, %v1528
  %v1530 = vpop.f32.mrf.mxu0
  %1531 = vmatprep.mubr.bf16.mxu0 0
  %1532 = vmatmul.mubr.bf16.gmra.mxu0 %v1411
  %v1533 = vpop.f32.mrf.mxu0
  %v1534 = vadd.f32 %v60, %v1533
  %v1535 = vpop.f32.mrf.mxu0
  %v1536 = vpop.f32.mrf.mxu0
  %v1537 = vadd.f32 %v60, %v1536
  %v1538 = vpop.f32.mrf.mxu0
  %1539 = vmatprep.mubr.bf16.mxu0 0
  %1540 = vmatmul.mubr.bf16.gmra.mxu0 %v1414
  %v1541 = vpop.f32.mrf.mxu0
  %v1542 = vadd.f32 %v60, %v1541
  %v1543 = vpop.f32.mrf.mxu0
  %v1544 = vpop.f32.mrf.mxu0
  %v1545 = vadd.f32 %v60, %v1544
  %v1546 = vpop.f32.mrf.mxu0
  %1547 = vmatprep.mubr.bf16.mxu0 0
  %1548 = vmatmul.mubr.bf16.gmra.mxu0 %v1417
  %v1549 = vpop.f32.mrf.mxu0
  %v1550 = vadd.f32 %v60, %v1549
  %v1551 = vpop.f32.mrf.mxu0
  %v1552 = vpop.f32.mrf.mxu0
  %v1553 = vadd.f32 %v60, %v1552
  %v1554 = vpop.f32.mrf.mxu0
  %1555 = vmatprep.mubr.bf16.mxu0 0
  %1556 = vmatmul.mubr.bf16.gmra.mxu0 %v1420
  %v1557 = vpop.f32.mrf.mxu0
  %v1558 = vadd.f32 %v60, %v1557
  %v1559 = vpop.f32.mrf.mxu0
  %v1560 = vpop.f32.mrf.mxu0
  %v1561 = vadd.f32 %v60, %v1560
  %v1562 = vpop.f32.mrf.mxu0
  %1563 = vmatprep.mubr.bf16.mxu0 0
  %1564 = vmatmul.mubr.bf16.gmra.mxu0 %v1423
  %v1565 = vpop.f32.mrf.mxu0
  %v1566 = vadd.f32 %v60, %v1565
  %v1567 = vpop.f32.mrf.mxu0
  %v1568 = vpop.f32.mrf.mxu0
  %v1569 = vadd.f32 %v60, %v1568
  %v1570 = vpop.f32.mrf.mxu0
  %1571 = vmatprep.mubr.bf16.mxu0 0
  %1572 = vmatmul.mubr.bf16.gmra.mxu0 %v1426
  %v1573 = vpop.f32.mrf.mxu0
  %v1574 = vadd.f32 %v60, %v1573
  %v1575 = vpop.f32.mrf.mxu0
  %v1576 = vpop.f32.mrf.mxu0
  %v1577 = vadd.f32 %v60, %v1576
  %v1578 = vpop.f32.mrf.mxu0
  %1579 = vmatprep.mubr.bf16.mxu0 0
  %1580 = vmatmul.mubr.bf16.gmra.mxu0 %v1429
  %v1581 = vpop.f32.mrf.mxu0
  %v1582 = vadd.f32 %v60, %v1581
  %v1583 = vpop.f32.mrf.mxu0
  %v1584 = vpop.f32.mrf.mxu0
  %v1585 = vadd.f32 %v60, %v1584
  %v1586 = vpop.f32.mrf.mxu0
  %1587 = vmatprep.mubr.bf16.mxu0 0
  %1588 = vmatmul.mubr.bf16.gmra.mxu0 %v1432
  %v1589 = vpop.f32.mrf.mxu0
  %v1590 = vadd.f32 %v60, %v1589
  %v1591 = vpop.f32.mrf.mxu0
  %v1592 = vpop.f32.mrf.mxu0
  %v1593 = vadd.f32 %v60, %v1592
  %v1594 = vpop.f32.mrf.mxu0
  %1595 = vmatprep.mubr.bf16.mxu0 0
  %1596 = vmatmul.mubr.bf16.gmra.mxu0 %v1435
  %v1597 = vpop.f32.mrf.mxu0
  %v1598 = vadd.f32 %v60, %v1597
  %v1599 = vpop.f32.mrf.mxu0
  %v1600 = vpop.f32.mrf.mxu0
  %v1601 = vadd.f32 %v60, %v1600
  %v1602 = vpop.f32.mrf.mxu0
  %1603 = vmatprep.mubr.bf16.mxu0 0
  %1604 = vmatmul.mubr.bf16.gmra.mxu0 %v1438
  %v1605 = vpop.f32.mrf.mxu0
  %v1606 = vadd.f32 %v60, %v1605
  %v1607 = vpop.f32.mrf.mxu0
  %v1608 = vpop.f32.mrf.mxu0
  %v1609 = vadd.f32 %v60, %v1608
  %v1610 = vpop.f32.mrf.mxu0
  %1611 = vmatprep.mubr.bf16.mxu0 0
  %1612 = vmatmul.mubr.bf16.gmra.mxu0 %v1441
  %v1613 = vpop.f32.mrf.mxu0
  %v1614 = vadd.f32 %v60, %v1613
  %v1615 = vpop.f32.mrf.mxu0
  %v1616 = vpop.f32.mrf.mxu0
  %v1617 = vadd.f32 %v60, %v1616
  %v1618 = vpop.f32.mrf.mxu0
  %1619 = vdwg.mxu0
  %v1620 = vmax.f32 %v1478, 0.0
  %v1621 = vmax.f32 %v1481, 0.0
  %v1622 = vmax.f32 %v1486, 0.0
  %v1623 = vmax.f32 %v1489, 0.0
  %v1624 = vmax.f32 %v1494, 0.0
  %v1625 = vmax.f32 %v1497, 0.0
  %v1626 = vmax.f32 %v1502, 0.0
  %v1627 = vmax.f32 %v1505, 0.0
  %v1628 = vmax.f32 %v1510, 0.0
  %v1629 = vmax.f32 %v1513, 0.0
  %v1630 = vmax.f32 %v1518, 0.0
  %v1631 = vmax.f32 %v1521, 0.0
  %v1632 = vmax.f32 %v1526, 0.0
  %v1633 = vmax.f32 %v1529, 0.0
  %v1634 = vmax.f32 %v1534, 0.0
  %v1635 = vmax.f32 %v1537, 0.0
  %v1636 = vmax.f32 %v1542, 0.0
  %v1637 = vmax.f32 %v1545, 0.0
  %v1638 = vmax.f32 %v1550, 0.0
  %v1639 = vmax.f32 %v1553, 0.0
  %v1640 = vmax.f32 %v1558, 0.0
  %v1641 = vmax.f32 %v1561, 0.0
  %v1642 = vmax.f32 %v1566, 0.0
  %v1643 = vmax.f32 %v1569, 0.0
  %v1644 = vmax.f32 %v1574, 0.0
  %v1645 = vmax.f32 %v1577, 0.0
  %v1646 = vmax.f32 %v1582, 0.0
  %v1647 = vmax.f32 %v1585, 0.0
  %v1648 = vmax.f32 %v1590, 0.0
  %v1649 = vmax.f32 %v1593, 0.0
  %v1650 = vmax.f32 %v1598, 0.0
  %v1651 = vmax.f32 %v1601, 0.0
  %v1652 = vmax.f32 %v1606, 0.0
  %v1653 = vmax.f32 %v1609, 0.0
  %v1654 = vmax.f32 %v1614, 0.0
  %v1655 = vmax.f32 %v1617, 0.0
  %v1656 = vmax.f32 %v1226, %v1620
  %v1657 = vmax.f32 %v1227, %v1621
  %v1658 = vmax.f32 %v1228, %v1622
  %v1659 = vmax.f32 %v1229, %v1623
  %v1660 = vmax.f32 %v1230, %v1624
  %v1661 = vmax.f32 %v1231, %v1625
  %v1662 = vmax.f32 %v1232, %v1626
  %v1663 = vmax.f32 %v1233, %v1627
  %v1664 = vmax.f32 %v1234, %v1628
  %v1665 = vmax.f32 %v1235, %v1629
  %v1666 = vmax.f32 %v1236, %v1630
  %v1667 = vmax.f32 %v1237, %v1631
  %v1668 = vmax.f32 %v1238, %v1632
  %v1669 = vmax.f32 %v1239, %v1633
  %v1670 = vmax.f32 %v1240, %v1634
  %v1671 = vmax.f32 %v1241, %v1635
  %v1672 = vmax.f32 %v1242, %v1636
  %v1673 = vmax.f32 %v1243, %v1637
  %v1674 = vmax.f32 %v1244, %v1638
  %v1675 = vmax.f32 %v1245, %v1639
  %v1676 = vmax.f32 %v1246, %v1640
  %v1677 = vmax.f32 %v1247, %v1641
  %v1678 = vmax.f32 %v1248, %v1642
  %v1679 = vmax.f32 %v1249, %v1643
  %v1680 = vmax.f32 %v1250, %v1644
  %v1681 = vmax.f32 %v1251, %v1645
  %v1682 = vmax.f32 %v1252, %v1646
  %v1683 = vmax.f32 %v1253, %v1647
  %v1684 = vmax.f32 %v1254, %v1648
  %v1685 = vmax.f32 %v1255, %v1649
  %v1686 = vmax.f32 %v1256, %v1650
  %v1687 = vmax.f32 %v1257, %v1651
  %v1688 = vmax.f32 %v1258, %v1652
  %v1689 = vmax.f32 %v1259, %v1653
  %v1690 = vmax.f32 %v1260, %v1654
  %v1691 = vmax.f32 %v1261, %v1655
  %v1692 = vmax.f32 %v832, %v1656
  %v1693 = vmax.f32 %v833, %v1657
  %v1694 = vmax.f32 %v834, %v1658
  %v1695 = vmax.f32 %v835, %v1659
  %v1696 = vmax.f32 %v836, %v1660
  %v1697 = vmax.f32 %v837, %v1661
  %v1698 = vmax.f32 %v838, %v1662
  %v1699 = vmax.f32 %v839, %v1663
  %v1700 = vmax.f32 %v840, %v1664
  %v1701 = vmax.f32 %v841, %v1665
  %v1702 = vmax.f32 %v842, %v1666
  %v1703 = vmax.f32 %v843, %v1667
  %v1704 = vmax.f32 %v844, %v1668
  %v1705 = vmax.f32 %v845, %v1669
  %v1706 = vmax.f32 %v846, %v1670
  %v1707 = vmax.f32 %v847, %v1671
  %v1708 = vmax.f32 %v848, %v1672
  %v1709 = vmax.f32 %v849, %v1673
  %v1710 = vmax.f32 %v850, %v1674
  %v1711 = vmax.f32 %v851, %v1675
  %v1712 = vmax.f32 %v852, %v1676
  %v1713 = vmax.f32 %v853, %v1677
  %v1714 = vmax.f32 %v854, %v1678
  %v1715 = vmax.f32 %v855, %v1679
  %v1716 = vmax.f32 %v856, %v1680
  %v1717 = vmax.f32 %v857, %v1681
  %v1718 = vmax.f32 %v858, %v1682
  %v1719 = vmax.f32 %v859, %v1683
  %v1720 = vmax.f32 %v860, %v1684
  %v1721 = vmax.f32 %v861, %v1685
  %v1722 = vmax.f32 %v862, %v1686
  %v1723 = vmax.f32 %v863, %v1687
  %v1724 = vmax.f32 %v864, %v1688
  %v1725 = vmax.f32 %v865, %v1689
  %v1726 = vmax.f32 %v866, %v1690
  %v1727 = vmax.f32 %v867, %v1691
  %1728 = vst [vmem:[%s3] sm:$0xff] %v1692
  %1729 = vst [vmem:[%s3 + $0x8] sm:$0xff] %v1693
  %1730 = vst [vmem:[%s3 + $0x10] sm:$0xff] %v1694
  %1731 = vst [vmem:[%s3 + $0x18] sm:$0xff] %v1695
  %1732 = vst [vmem:[%s3 + $0x20] sm:$0xff] %v1696
  %1733 = vst [vmem:[%s3 + $0x28] sm:$0xff] %v1697
  %1734 = vst [vmem:[%s3 + $0x30] sm:$0xff] %v1698
  %1735 = vst [vmem:[%s3 + $0x38] sm:$0xff] %v1699
  %1736 = vst [vmem:[%s3 + $0x40] sm:$0xff] %v1700
  %1737 = vst [vmem:[%s3 + $0x48] sm:$0xff] %v1701
  %1738 = vst [vmem:[%s3 + $0x50] sm:$0xff] %v1702
  %1739 = vst [vmem:[%s3 + $0x58] sm:$0xff] %v1703
  %1740 = vst [vmem:[%s3 + $0x60] sm:$0xff] %v1704
  %1741 = vst [vmem:[%s3 + $0x68] sm:$0xff] %v1705
  %1742 = vst [vmem:[%s3 + $0x70] sm:$0xff] %v1706
  %1743 = vst [vmem:[%s3 + $0x78] sm:$0xff] %v1707
  %1744 = vst [vmem:[%s3 + $0x80] sm:$0xff] %v1708
  %1745 = vst [vmem:[%s3 + $0x88] sm:$0xff] %v1709
  %1746 = vst [vmem:[%s3 + $0x90] sm:$0xff] %v1710
  %1747 = vst [vmem:[%s3 + $0x98] sm:$0xff] %v1711
  %1748 = vst [vmem:[%s3 + $0xa0] sm:$0xff] %v1712
  %1749 = vst [vmem:[%s3 + $0xa8] sm:$0xff] %v1713
  %1750 = vst [vmem:[%s3 + $0xb0] sm:$0xff] %v1714
  %1751 = vst [vmem:[%s3 + $0xb8] sm:$0xff] %v1715
  %1752 = vst [vmem:[%s3 + $0xc0] sm:$0xff] %v1716
  %1753 = vst [vmem:[%s3 + $0xc8] sm:$0xff] %v1717
  %1754 = vst [vmem:[%s3 + $0xd0] sm:$0xff] %v1718
  %1755 = vst [vmem:[%s3 + $0xd8] sm:$0xff] %v1719
  %1756 = vst [vmem:[%s3 + $0xe0] sm:$0xff] %v1720
  %1757 = vst [vmem:[%s3 + $0xe8] sm:$0xff] %v1721
  %1758 = vst [vmem:[%s3 + $0xf0] sm:$0xff] %v1722
  %1759 = vst [vmem:[%s3 + $0xf8] sm:$0xff] %v1723
  %1760 = vst [vmem:[%s3 + $0x100] sm:$0xff] %v1724
  %1761 = vst [vmem:[%s3 + $0x108] sm:$0xff] %v1725
  %1762 = vst [vmem:[%s3 + $0x110] sm:$0xff] %v1726
  %1763 = vst [vmem:[%s3 + $0x118] sm:$0xff] %v1727
  // Predicated region
  $region14: #{convnet_forward.3} parent=0 // pred_check
    _
  $region15: #{convnet_forward.3} parent=0 // pred_check_branch
    %1765 = sbr.rel (0) target = $region17
  $region16: #{convnet_forward.3} parent=0 // pred_region
    _
  $region17: #{convnet_forward.3} parent=0 // pred_fallthru
    _
  // Predicated region
  $region18: #{convnet_forward.3} parent=0 // pred_check
    _
  $region19: #{convnet_forward.3} parent=0 // pred_check_branch
    %1767 = sbr.rel (0) target = $region21
  $region20: #{convnet_forward.3} parent=0 // pred_region
    _
  $region21: #{convnet_forward.3} parent=0 // pred_fallthru
    _

// kernel: convnet_forward.4
$region0: #{convnet_forward.4}
  #allocation0 [shape = 'u32[]', space=smem, size = 0x4, offset = 0x4, fixed_abs, tag = 'smem constant byte address 0x4 - core index']
  #allocation1 [shape = 'u32[144,128]{1,0:T(1,128)}', space=vmem, size = 0x12000, scoped, tag = 'internal scratch']
  %s0 = inlined_call_operand.vmem [shape: bf16[4,32,150], index: 0, kind: input, shape index: {}]
  %s1 = inlined_call_operand.vmem [shape: bf16[150,128], index: 1, kind: input, shape index: {}]
  %s2 = inlined_call_operand.vmem [shape: f32[1,128], index: 2, kind: input, shape index: {}]
  %s3 = inlined_call_operand.vmem [shape: f32[32,128], index: 3, kind: output, shape index: {}]
  %s4 = sld [smem:[#allocation0]]
  $region22: #{convnet_forward.4} parent=0
    _
  %s6 = ssub.s32 1, %s4
  %s7 = scalar_select 0, %s6, %s4
  // Predicated region
  $region2: #{convnet_forward.4} parent=0 // pred_check
    _
  $region3: #{convnet_forward.4} parent=0 // pred_check_branch
    %9 = sbr.rel (0) target = $region5
  $region4: #{convnet_forward.4} parent=0 // pred_region
    _
  $region5: #{convnet_forward.4} parent=0 // pred_fallthru
    _
  // Predicated region
  $region6: #{convnet_forward.4} parent=0 // pred_check
    _
  $region7: #{convnet_forward.4} parent=0 // pred_check_branch
    %11 = sbr.rel (0) target = $region9
  $region8: #{convnet_forward.4} parent=0 // pred_region
    _
  $region9: #{convnet_forward.4} parent=0 // pred_fallthru
    _
  // Predicated region
  $region10: #{convnet_forward.4} parent=0 // pred_check
    _
  $region11: #{convnet_forward.4} parent=0 // pred_check_branch
    %13 = sbr.rel (0) target = $region13
  $region12: #{convnet_forward.4} parent=0 // pred_region
    _
  $region13: #{convnet_forward.4} parent=0 // pred_fallthru
    _
  %v15 = vld [vmem:[%s1] sm:$0xf]
  %v16 = vld [vmem:[%s1 + $0x4] sm:$0xf]
  %v17 = vld [vmem:[%s1 + $0x8] sm:$0xf]
  %v18 = vld [vmem:[%s1 + $0xc] sm:$0xf]
  %v19 = vld [vmem:[%s1 + $0x10] sm:$0xf]
  %v20 = vld [vmem:[%s1 + $0x14] sm:$0xf]
  %v21 = vld [vmem:[%s1 + $0x18] sm:$0xf]
  %v22 = vld [vmem:[%s1 + $0x1c] sm:$0xf]
  %v23 = vld [vmem:[%s1 + $0x20] sm:$0xf]
  %v24 = vld [vmem:[%s1 + $0x24] sm:$0xf]
  %v25 = vld [vmem:[%s1 + $0x28] sm:$0xf]
  %v26 = vld [vmem:[%s1 + $0x2c] sm:$0xf]
  %v27 = vld [vmem:[%s1 + $0x30] sm:$0xf]
  %v28 = vld [vmem:[%s1 + $0x34] sm:$0xf]
  %v29 = vld [vmem:[%s1 + $0x38] sm:$0xf]
  %v30 = vld [vmem:[%s1 + $0x3c] sm:$0xf]
  %v31 = vld [vmem:[%s1 + $0x40] sm:$0xf]
  %v32 = vld [vmem:[%s1 + $0x44] sm:$0xf]
  %v33 = vld [vmem:[%s1 + $0x48] sm:$0x7]
  %v34 = vld [vmem:[%s2] sm:$0x1]
  %v35 = vld [vmem:[%s0] sm:$0xff]
  %v36 = vld [vmem:[%s0 + $0x8] sm:$0xff]
  %v37 = vld [vmem:[%s0 + $0x10] sm:$0xff]
  %v38 = vld [vmem:[%s0 + $0x18] sm:$0xff]
  %v40 = vlaneseq
  %v41 = vshrl.u32 %v40, 7
  %v42 = vsub.s32 0, %v41
  %v43 = vrot.slane %v34, %v42
  %v49 = vunpack.c.l.b16 %v35
  %v50 = vunpack.c.h.b16 %v35
  %v51 = vunpack.c.l.b16 %v36
  %v52 = vunpack.c.h.b16 %v36
  %v53 = vunpack.c.l.b16 %v37
  %v54 = vunpack.c.h.b16 %v37
  %v55 = vunpack.c.l.b16 %v38
  %v56 = vunpack.c.h.b16 %v38
  %v57 = vpack.c.b16 %v51, %v49
  %v58 = vpack.c.b16 %v52, %v50
  %v59 = vpack.c.b16 %v55, %v53
  %v60 = vpack.c.b16 %v56, %v54
  %v82 = vunpack.c.l.b16 %v15
  %v83 = vunpack.c.l.b16 %v16
  %v84 = vunpack.c.l.b16 %v17
  %v85 = vunpack.c.l.b16 %v18
  %v86 = vunpack.c.l.b16 %v19
  %v87 = vunpack.c.l.b16 %v20
  %v88 = vunpack.c.l.b16 %v21
  %v89 = vunpack.c.l.b16 %v22
  %v90 = vunpack.c.l.b16 %v23
  %v91 = vunpack.c.l.b16 %v24
  %v92 = vunpack.c.l.b16 %v25
  %v93 = vunpack.c.l.b16 %v26
  %v94 = vunpack.c.l.b16 %v27
  %v95 = vunpack.c.l.b16 %v28
  %v96 = vunpack.c.l.b16 %v29
  %v97 = vunpack.c.l.b16 %v30
  %v98 = vunpack.c.l.b16 %v31
  %v99 = vunpack.c.l.b16 %v32
  %v100 = vunpack.c.l.b16 %v33
  %v101 = vpack.c.b16 %v83, %v82
  %v102 = vpack.c.b16 %v85, %v84
  %v103 = vpack.c.b16 %v87, %v86
  %v104 = vpack.c.b16 %v89, %v88
  %v105 = vpack.c.b16 %v91, %v90
  %v106 = vpack.c.b16 %v93, %v92
  %v107 = vpack.c.b16 %v95, %v94
  %v108 = vpack.c.b16 %v97, %v96
  %v109 = vpack.c.b16 %v99, %v98
  %v110 = vpack.c.b16 %v100, %v100
  %vm120 = vcmask 179200
  %v122 = vsel %vm120, %v58, 0
  %v125 = vsel %vm120, %v60, 0
  %vm127 = vcmask 1042432
  %v129 = vsel %vm127, %v110, 0
  %131 = vmatprep.subr.bf16.mxu0 0
  %132 = vmatpush1.bf16.msra.mxu0 %v108
  %133 = vmatprep.subr.bf16.mxu0 0
  %134 = vmatpush1.bf16.msra.mxu0 %v107
  %135 = vmatprep.subr.bf16.mxu0 0
  %136 = vmatpush1.bf16.msra.mxu0 %v106
  %137 = vmatprep.subr.bf16.mxu0 0
  %138 = vmatpush1.bf16.msra.mxu0 %v105
  %139 = vmatprep.subr.bf16.mxu0 0
  %140 = vmatpush1.bf16.msra.mxu0 %v104
  %141 = vmatprep.subr.bf16.mxu0 0
  %142 = vmatpush1.bf16.msra.mxu0 %v103
  %143 = vmatprep.subr.bf16.mxu0 0
  %144 = vmatpush1.bf16.msra.mxu0 %v102
  %145 = vmatprep.subr.bf16.mxu0 0
  %146 = vmatpush1.bf16.msra.mxu0 %v101
  %147 = vmatprep.subr.bf16.mxu0 0
  %148 = vmatpush2.bf16.msra.mxu0 0
  %149 = vmatprep.subr.bf16.mxu0 0
  %150 = vmatpush2.bf16.msra.mxu0 0
  %151 = vmatprep.subr.bf16.mxu0 0
  %152 = vmatpush2.bf16.msra.mxu0 0
  %153 = vmatprep.subr.bf16.mxu0 0
  %154 = vmatpush2.bf16.msra.mxu0 0
  %155 = vmatprep.subr.bf16.mxu0 0
  %156 = vmatpush2.bf16.msra.mxu0 0
  %157 = vmatprep.subr.bf16.mxu0 0
  %158 = vmatpush2.bf16.msra.mxu0 0
  %159 = vmatprep.subr.bf16.mxu0 0
  %160 = vmatpush2.bf16.msra.mxu0 %v129
  %161 = vmatprep.subr.bf16.mxu0 0
  %162 = vmatpush2.bf16.msra.mxu0 %v109
  %163 = vmatprep.mubr.bf16.mxu0 %v122
  %164 = vmatmul.mubr.bf16.gmra.mxu0 %v57
  %v165 = vpop.f32.mrf.mxu0
  %v166 = vadd.f32 %v43, %v165
  %v167 = vpop.f32.mrf.mxu0
  %v168 = vpop.f32.mrf.mxu0
  %v169 = vadd.f32 %v43, %v168
  %v170 = vpop.f32.mrf.mxu0
  %171 = vmatprep.mubr.bf16.mxu0 %v125
  %172 = vmatmul.mubr.bf16.gmra.mxu0 %v59
  %v173 = vpop.f32.mrf.mxu0
  %v174 = vadd.f32 %v43, %v173
  %v175 = vpop.f32.mrf.mxu0
  %v176 = vpop.f32.mrf.mxu0
  %v177 = vadd.f32 %v43, %v176
  %v178 = vpop.f32.mrf.mxu0
  %179 = vdwg.mxu0
  %v180 = vmax.f32 %v166, 0.0
  %v181 = vmax.f32 %v169, 0.0
  %v182 = vmax.f32 %v174, 0.0
  %v183 = vmax.f32 %v177, 0.0
  %s184 = scalar_lea.vmem %s0, 32
  %v185 = vld [vmem:[%s184] sm:$0xff]
  %v186 = vld [vmem:[%s184 + $0x8] sm:$0xff]
  %v187 = vld [vmem:[%s184 + $0x10] sm:$0xff]
  %v188 = vld [vmem:[%s184 + $0x18] sm:$0xff]
  %v193 = vunpack.c.l.b16 %v185
  %v194 = vunpack.c.h.b16 %v185
  %v195 = vunpack.c.l.b16 %v186
  %v196 = vunpack.c.h.b16 %v186
  %v197 = vunpack.c.l.b16 %v187
  %v198 = vunpack.c.h.b16 %v187
  %v199 = vunpack.c.l.b16 %v188
  %v200 = vunpack.c.h.b16 %v188
  %v201 = vpack.c.b16 %v195, %v193
  %v202 = vpack.c.b16 %v196, %v194
  %v203 = vpack.c.b16 %v199, %v197
  %v204 = vpack.c.b16 %v200, %v198
  %v208 = vsel %vm120, %v202, 0
  %v211 = vsel %vm120, %v204, 0
  %213 = vmatprep.subr.bf16.mxu0 0
  %214 = vmatpush1.bf16.msra.mxu0 %v108
  %215 = vmatprep.subr.bf16.mxu0 0
  %216 = vmatpush1.bf16.msra.mxu0 %v107
  %217 = vmatprep.subr.bf16.mxu0 0
  %218 = vmatpush1.bf16.msra.mxu0 %v106
  %219 = vmatprep.subr.bf16.mxu0 0
  %220 = vmatpush1.bf16.msra.mxu0 %v105
  %221 = vmatprep.subr.bf16.mxu0 0
  %222 = vmatpush1.bf16.msra.mxu0 %v104
  %223 = vmatprep.subr.bf16.mxu0 0
  %224 = vmatpush1.bf16.msra.mxu0 %v103
  %225 = vmatprep.subr.bf16.mxu0 0
  %226 = vmatpush1.bf16.msra.mxu0 %v102
  %227 = vmatprep.subr.bf16.mxu0 0
  %228 = vmatpush1.bf16.msra.mxu0 %v101
  %229 = vmatprep.subr.bf16.mxu0 0
  %230 = vmatpush2.bf16.msra.mxu0 0
  %231 = vmatprep.subr.bf16.mxu0 0
  %232 = vmatpush2.bf16.msra.mxu0 0
  %233 = vmatprep.subr.bf16.mxu0 0
  %234 = vmatpush2.bf16.msra.mxu0 0
  %235 = vmatprep.subr.bf16.mxu0 0
  %236 = vmatpush2.bf16.msra.mxu0 0
  %237 = vmatprep.subr.bf16.mxu0 0
  %238 = vmatpush2.bf16.msra.mxu0 0
  %239 = vmatprep.subr.bf16.mxu0 0
  %240 = vmatpush2.bf16.msra.mxu0 0
  %241 = vmatprep.subr.bf16.mxu0 0
  %242 = vmatpush2.bf16.msra.mxu0 %v129
  %243 = vmatprep.subr.bf16.mxu0 0
  %244 = vmatpush2.bf16.msra.mxu0 %v109
  %245 = vmatprep.mubr.bf16.mxu0 %v208
  %246 = vmatmul.mubr.bf16.gmra.mxu0 %v201
  %v247 = vpop.f32.mrf.mxu0
  %v248 = vadd.f32 %v43, %v247
  %v249 = vpop.f32.mrf.mxu0
  %v250 = vpop.f32.mrf.mxu0
  %v251 = vadd.f32 %v43, %v250
  %v252 = vpop.f32.mrf.mxu0
  %253 = vmatprep.mubr.bf16.mxu0 %v211
  %254 = vmatmul.mubr.bf16.gmra.mxu0 %v203
  %v255 = vpop.f32.mrf.mxu0
  %v256 = vadd.f32 %v43, %v255
  %v257 = vpop.f32.mrf.mxu0
  %v258 = vpop.f32.mrf.mxu0
  %v259 = vadd.f32 %v43, %v258
  %v260 = vpop.f32.mrf.mxu0
  %261 = vdwg.mxu0
  %v262 = vmax.f32 %v248, 0.0
  %v263 = vmax.f32 %v251, 0.0
  %v264 = vmax.f32 %v256, 0.0
  %v265 = vmax.f32 %v259, 0.0
  %v266 = vmax.f32 %v180, %v262
  %v267 = vmax.f32 %v181, %v263
  %v268 = vmax.f32 %v182, %v264
  %v269 = vmax.f32 %v183, %v265
  %s270 = scalar_lea.vmem %s0, 64
  %v271 = vld [vmem:[%s270] sm:$0xff]
  %v272 = vld [vmem:[%s270 + $0x8] sm:$0xff]
  %v273 = vld [vmem:[%s270 + $0x10] sm:$0xff]
  %v274 = vld [vmem:[%s270 + $0x18] sm:$0xff]
  %v279 = vunpack.c.l.b16 %v271
  %v280 = vunpack.c.h.b16 %v271
  %v281 = vunpack.c.l.b16 %v272
  %v282 = vunpack.c.h.b16 %v272
  %v283 = vunpack.c.l.b16 %v273
  %v284 = vunpack.c.h.b16 %v273
  %v285 = vunpack.c.l.b16 %v274
  %v286 = vunpack.c.h.b16 %v274
  %v287 = vpack.c.b16 %v281, %v279
  %v288 = vpack.c.b16 %v282, %v280
  %v289 = vpack.c.b16 %v285, %v283
  %v290 = vpack.c.b16 %v286, %v284
  %v294 = vsel %vm120, %v288, 0
  %v297 = vsel %vm120, %v290, 0
  %299 = vmatprep.subr.bf16.mxu0 0
  %300 = vmatpush1.bf16.msra.mxu0 %v108
  %301 = vmatprep.subr.bf16.mxu0 0
  %302 = vmatpush1.bf16.msra.mxu0 %v107
  %303 = vmatprep.subr.bf16.mxu0 0
  %304 = vmatpush1.bf16.msra.mxu0 %v106
  %305 = vmatprep.subr.bf16.mxu0 0
  %306 = vmatpush1.bf16.msra.mxu0 %v105
  %307 = vmatprep.subr.bf16.mxu0 0
  %308 = vmatpush1.bf16.msra.mxu0 %v104
  %309 = vmatprep.subr.bf16.mxu0 0
  %310 = vmatpush1.bf16.msra.mxu0 %v103
  %311 = vmatprep.subr.bf16.mxu0 0
  %312 = vmatpush1.bf16.msra.mxu0 %v102
  %313 = vmatprep.subr.bf16.mxu0 0
  %314 = vmatpush1.bf16.msra.mxu0 %v101
  %315 = vmatprep.subr.bf16.mxu0 0
  %316 = vmatpush2.bf16.msra.mxu0 0
  %317 = vmatprep.subr.bf16.mxu0 0
  %318 = vmatpush2.bf16.msra.mxu0 0
  %319 = vmatprep.subr.bf16.mxu0 0
  %320 = vmatpush2.bf16.msra.mxu0 0
  %321 = vmatprep.subr.bf16.mxu0 0
  %322 = vmatpush2.bf16.msra.mxu0 0
  %323 = vmatprep.subr.bf16.mxu0 0
  %324 = vmatpush2.bf16.msra.mxu0 0
  %325 = vmatprep.subr.bf16.mxu0 0
  %326 = vmatpush2.bf16.msra.mxu0 0
  %327 = vmatprep.subr.bf16.mxu0 0
  %328 = vmatpush2.bf16.msra.mxu0 %v129
  %329 = vmatprep.subr.bf16.mxu0 0
  %330 = vmatpush2.bf16.msra.mxu0 %v109
  %331 = vmatprep.mubr.bf16.mxu0 %v294
  %332 = vmatmul.mubr.bf16.gmra.mxu0 %v287
  %v333 = vpop.f32.mrf.mxu0
  %v334 = vadd.f32 %v43, %v333
  %v335 = vpop.f32.mrf.mxu0
  %v336 = vpop.f32.mrf.mxu0
  %v337 = vadd.f32 %v43, %v336
  %v338 = vpop.f32.mrf.mxu0
  %339 = vmatprep.mubr.bf16.mxu0 %v297
  %340 = vmatmul.mubr.bf16.gmra.mxu0 %v289
  %v341 = vpop.f32.mrf.mxu0
  %v342 = vadd.f32 %v43, %v341
  %v343 = vpop.f32.mrf.mxu0
  %v344 = vpop.f32.mrf.mxu0
  %v345 = vadd.f32 %v43, %v344
  %v346 = vpop.f32.mrf.mxu0
  %347 = vdwg.mxu0
  %v348 = vmax.f32 %v334, 0.0
  %v349 = vmax.f32 %v337, 0.0
  %v350 = vmax.f32 %v342, 0.0
  %v351 = vmax.f32 %v345, 0.0
  %s352 = scalar_lea.vmem %s0, 96
  %v353 = vld [vmem:[%s352] sm:$0xff]
  %v354 = vld [vmem:[%s352 + $0x8] sm:$0xff]
  %v355 = vld [vmem:[%s352 + $0x10] sm:$0xff]
  %v356 = vld [vmem:[%s352 + $0x18] sm:$0xff]
  %v361 = vunpack.c.l.b16 %v353
  %v362 = vunpack.c.h.b16 %v353
  %v363 = vunpack.c.l.b16 %v354
  %v364 = vunpack.c.h.b16 %v354
  %v365 = vunpack.c.l.b16 %v355
  %v366 = vunpack.c.h.b16 %v355
  %v367 = vunpack.c.l.b16 %v356
  %v368 = vunpack.c.h.b16 %v356
  %v369 = vpack.c.b16 %v363, %v361
  %v370 = vpack.c.b16 %v364, %v362
  %v371 = vpack.c.b16 %v367, %v365
  %v372 = vpack.c.b16 %v368, %v366
  %v376 = vsel %vm120, %v370, 0
  %v379 = vsel %vm120, %v372, 0
  %381 = vmatprep.subr.bf16.mxu0 0
  %382 = vmatpush1.bf16.msra.mxu0 %v108
  %383 = vmatprep.subr.bf16.mxu0 0
  %384 = vmatpush1.bf16.msra.mxu0 %v107
  %385 = vmatprep.subr.bf16.mxu0 0
  %386 = vmatpush1.bf16.msra.mxu0 %v106
  %387 = vmatprep.subr.bf16.mxu0 0
  %388 = vmatpush1.bf16.msra.mxu0 %v105
  %389 = vmatprep.subr.bf16.mxu0 0
  %390 = vmatpush1.bf16.msra.mxu0 %v104
  %391 = vmatprep.subr.bf16.mxu0 0
  %392 = vmatpush1.bf16.msra.mxu0 %v103
  %393 = vmatprep.subr.bf16.mxu0 0
  %394 = vmatpush1.bf16.msra.mxu0 %v102
  %395 = vmatprep.subr.bf16.mxu0 0
  %396 = vmatpush1.bf16.msra.mxu0 %v101
  %397 = vmatprep.subr.bf16.mxu0 0
  %398 = vmatpush2.bf16.msra.mxu0 0
  %399 = vmatprep.subr.bf16.mxu0 0
  %400 = vmatpush2.bf16.msra.mxu0 0
  %401 = vmatprep.subr.bf16.mxu0 0
  %402 = vmatpush2.bf16.msra.mxu0 0
  %403 = vmatprep.subr.bf16.mxu0 0
  %404 = vmatpush2.bf16.msra.mxu0 0
  %405 = vmatprep.subr.bf16.mxu0 0
  %406 = vmatpush2.bf16.msra.mxu0 0
  %407 = vmatprep.subr.bf16.mxu0 0
  %408 = vmatpush2.bf16.msra.mxu0 0
  %409 = vmatprep.subr.bf16.mxu0 0
  %410 = vmatpush2.bf16.msra.mxu0 %v129
  %411 = vmatprep.subr.bf16.mxu0 0
  %412 = vmatpush2.bf16.msra.mxu0 %v109
  %413 = vmatprep.mubr.bf16.mxu0 %v376
  %414 = vmatmul.mubr.bf16.gmra.mxu0 %v369
  %v415 = vpop.f32.mrf.mxu0
  %v416 = vadd.f32 %v43, %v415
  %v417 = vpop.f32.mrf.mxu0
  %v418 = vpop.f32.mrf.mxu0
  %v419 = vadd.f32 %v43, %v418
  %v420 = vpop.f32.mrf.mxu0
  %421 = vmatprep.mubr.bf16.mxu0 %v379
  %422 = vmatmul.mubr.bf16.gmra.mxu0 %v371
  %v423 = vpop.f32.mrf.mxu0
  %v424 = vadd.f32 %v43, %v423
  %v425 = vpop.f32.mrf.mxu0
  %v426 = vpop.f32.mrf.mxu0
  %v427 = vadd.f32 %v43, %v426
  %v428 = vpop.f32.mrf.mxu0
  %429 = vdwg.mxu0
  %v430 = vmax.f32 %v416, 0.0
  %v431 = vmax.f32 %v419, 0.0
  %v432 = vmax.f32 %v424, 0.0
  %v433 = vmax.f32 %v427, 0.0
  %v434 = vmax.f32 %v348, %v430
  %v435 = vmax.f32 %v349, %v431
  %v436 = vmax.f32 %v350, %v432
  %v437 = vmax.f32 %v351, %v433
  %v438 = vmax.f32 %v266, %v434
  %v439 = vmax.f32 %v267, %v435
  %v440 = vmax.f32 %v268, %v436
  %v441 = vmax.f32 %v269, %v437
  %442 = vst [vmem:[%s3] sm:$0xff] %v438
  %443 = vst [vmem:[%s3 + $0x8] sm:$0xff] %v439
  %444 = vst [vmem:[%s3 + $0x10] sm:$0xff] %v440
  %445 = vst [vmem:[%s3 + $0x18] sm:$0xff] %v441
  // Predicated region
  $region14: #{convnet_forward.4} parent=0 // pred_check
    _
  $region15: #{convnet_forward.4} parent=0 // pred_check_branch
    %447 = sbr.rel (0) target = $region17
  $region16: #{convnet_forward.4} parent=0 // pred_region
    _
  $region17: #{convnet_forward.4} parent=0 // pred_fallthru
    _
  // Predicated region
  $region18: #{convnet_forward.4} parent=0 // pred_check
    _
  $region19: #{convnet_forward.4} parent=0 // pred_check_branch
    %449 = sbr.rel (0) target = $region21
  $region20: #{convnet_forward.4} parent=0 // pred_region
    _
  $region21: #{convnet_forward.4} parent=0 // pred_fallthru
    _

// kernel: convnet_forward.5
$region0: #{convnet_forward.5}
  #allocation0 [shape = 'u32[]', space=smem, size = 0x4, offset = 0x4, fixed_abs, tag = 'smem constant byte address 0x4 - core index']
  #allocation1 [shape = 'u32[144,128]{1,0:T(1,128)}', space=vmem, size = 0x12000, scoped, tag = 'internal scratch']
  %s0 = inlined_call_operand.vmem [shape: f32[2,256], index: 0, kind: input, shape index: {}]
  %s1 = inlined_call_operand.vmem [shape: f32[256,128], index: 1, kind: input, shape index: {}]
  %s2 = inlined_call_operand.vmem [shape: f32[1,128], index: 2, kind: input, shape index: {}]
  %s3 = inlined_call_operand.vmem [shape: f32[128,128], index: 3, kind: input, shape index: {}]
  %s4 = inlined_call_operand.vmem [shape: f32[1,128], index: 4, kind: input, shape index: {}]
  %s5 = inlined_call_operand.vmem [shape: f32[128,128], index: 5, kind: input, shape index: {}]
  %s6 = inlined_call_operand.vmem [shape: f32[1,128], index: 6, kind: input, shape index: {}]
  %s7 = inlined_call_operand.hbm [shape: f32[2,128], index: 7, kind: output, shape index: {}]
  %s8 = sld [smem:[#allocation0]]
  $region38: #{convnet_forward.5} parent=0
    _
  %s10 = ssub.s32 1, %s8
  %s11 = scalar_select 0, %s10, %s8
  $region1: #{convnet_forward.5} parent=0
    #allocation2 [shape = 'u8[1024]{0}', space=vmem, size = 0x400, scoped, tag = 'output window, operand 0, single buffered']
    #allocation3 [shape = 's32[1]{0}', space=sflag, size = 0x4, scoped, tag = 'scoped memory for convnet_forward.5']
    %12 = vsyncpa [#allocation3], 0
    // Predicated region
    $region2: #{convnet_forward.5} parent=1 // pred_check
      _
    $region3: #{convnet_forward.5} parent=1 // pred_check_branch
      %14 = sbr.rel (0) target = $region5
    $region4: #{convnet_forward.5} parent=1 // pred_region
      _
    $region5: #{convnet_forward.5} parent=1 // pred_fallthru
      _
    // Predicated region
    $region6: #{convnet_forward.5} parent=1 // pred_check
      _
    $region7: #{convnet_forward.5} parent=1 // pred_check_branch
      %16 = sbr.rel (0) target = $region9
    $region8: #{convnet_forward.5} parent=1 // pred_region
      _
    $region9: #{convnet_forward.5} parent=1 // pred_fallthru
      _
    // Predicated region
    $region10: #{convnet_forward.5} parent=1 // pred_check
      _
    $region11: #{convnet_forward.5} parent=1 // pred_check_branch
      %18 = sbr.rel (0) target = $region13
    $region12: #{convnet_forward.5} parent=1 // pred_region
      _
    $region13: #{convnet_forward.5} parent=1 // pred_fallthru
      _
    // Predicated region
    $region14: #{convnet_forward.5} parent=1 // pred_check
      _
    $region15: #{convnet_forward.5} parent=1 // pred_check_branch
      %20 = sbr.rel (0) target = $region17
    $region16: #{convnet_forward.5} parent=1 // pred_region
      _
    $region17: #{convnet_forward.5} parent=1 // pred_fallthru
      _
    // Predicated region
    $region18: #{convnet_forward.5} parent=1 // pred_check
      _
    $region19: #{convnet_forward.5} parent=1 // pred_check_branch
      %22 = sbr.rel (0) target = $region21
    $region20: #{convnet_forward.5} parent=1 // pred_region
      _
    $region21: #{convnet_forward.5} parent=1 // pred_fallthru
      _
    // Predicated region
    $region22: #{convnet_forward.5} parent=1 // pred_check
      _
    $region23: #{convnet_forward.5} parent=1 // pred_check_branch
      %24 = sbr.rel (0) target = $region25
    $region24: #{convnet_forward.5} parent=1 // pred_region
      _
    $region25: #{convnet_forward.5} parent=1 // pred_fallthru
      _
    // Predicated region
    $region26: #{convnet_forward.5} parent=1 // pred_check
      _
    $region27: #{convnet_forward.5} parent=1 // pred_check_branch
      %26 = sbr.rel (0) target = $region29
    $region28: #{convnet_forward.5} parent=1 // pred_region
      _
    $region29: #{convnet_forward.5} parent=1 // pred_fallthru
      _
    %v27 = vld [vmem:[%s0] sm:$0xf]
    %v28 = vld [vmem:[%s1] sm:$0xff]
    %v29 = vld [vmem:[%s1 + $0x8] sm:$0xff]
    %v30 = vld [vmem:[%s1 + $0x10] sm:$0xff]
    %v31 = vld [vmem:[%s1 + $0x18] sm:$0xff]
    %v32 = vld [vmem:[%s1 + $0x20] sm:$0xff]
    %v33 = vld [vmem:[%s1 + $0x28] sm:$0xff]
    %v34 = vld [vmem:[%s1 + $0x30] sm:$0xff]
    %v35 = vld [vmem:[%s1 + $0x38] sm:$0xff]
    %v36 = vld [vmem:[%s1 + $0x40] sm:$0xff]
    %v37 = vld [vmem:[%s1 + $0x48] sm:$0xff]
    %v38 = vld [vmem:[%s1 + $0x50] sm:$0xff]
    %v39 = vld [vmem:[%s1 + $0x58] sm:$0xff]
    %v40 = vld [vmem:[%s1 + $0x60] sm:$0xff]
    %v41 = vld [vmem:[%s1 + $0x68] sm:$0xff]
    %v42 = vld [vmem:[%s1 + $0x70] sm:$0xff]
    %v43 = vld [vmem:[%s1 + $0x78] sm:$0xff]
    %v44 = vld [vmem:[%s1 + $0x80] sm:$0xff]
    %v45 = vld [vmem:[%s1 + $0x88] sm:$0xff]
    %v46 = vld [vmem:[%s1 + $0x90] sm:$0xff]
    %v47 = vld [vmem:[%s1 + $0x98] sm:$0xff]
    %v48 = vld [vmem:[%s1 + $0xa0] sm:$0xff]
    %v49 = vld [vmem:[%s1 + $0xa8] sm:$0xff]
    %v50 = vld [vmem:[%s1 + $0xb0] sm:$0xff]
    %v51 = vld [vmem:[%s1 + $0xb8] sm:$0xff]
    %v52 = vld [vmem:[%s1 + $0xc0] sm:$0xff]
    %v53 = vld [vmem:[%s1 + $0xc8] sm:$0xff]
    %v54 = vld [vmem:[%s1 + $0xd0] sm:$0xff]
    %v55 = vld [vmem:[%s1 + $0xd8] sm:$0xff]
    %v56 = vld [vmem:[%s1 + $0xe0] sm:$0xff]
    %v57 = vld [vmem:[%s1 + $0xe8] sm:$0xff]
    %v58 = vld [vmem:[%s1 + $0xf0] sm:$0xff]
    %v59 = vld [vmem:[%s1 + $0xf8] sm:$0xff]
    %v60 = vld [vmem:[%s2] sm:$0x1]
    %v62 = vlaneseq
    %v63 = vshrl.u32 %v62, 7
    %v64 = vsub.s32 0, %v63
    %v65 = vrot.slane %v60, %v64
    %v69 = vunpack.c.l.s4 1983009808
    %v70 = vunpack.c.0.s8 %v69
    %v71 = vlaneseq
    %v72 = vshrl.u32 %v71, 7
    %v73 = vsub.s32 %v70, %v72
    %v74 = vrot.slane %v27, %v73
    %v75 = vcombine.high %v74, %v74
    %78 = vmatprep.subr.mxu0 0.0
    %79 = vmatpush1.msra.mxu0 %v43
    %80 = vmatprep.subr.mxu0 0.0
    %81 = vmatpush1.msra.mxu0 %v42
    %82 = vmatprep.subr.mxu0 0.0
    %83 = vmatpush1.msra.mxu0 %v41
    %84 = vmatprep.subr.mxu0 0.0
    %85 = vmatpush1.msra.mxu0 %v40
    %86 = vmatprep.subr.mxu0 0.0
    %87 = vmatpush1.msra.mxu0 %v39
    %88 = vmatprep.subr.mxu0 0.0
    %89 = vmatpush1.msra.mxu0 %v38
    %90 = vmatprep.subr.mxu0 0.0
    %91 = vmatpush1.msra.mxu0 %v37
    %92 = vmatprep.subr.mxu0 0.0
    %93 = vmatpush1.msra.mxu0 %v36
    %94 = vmatprep.subr.mxu0 0.0
    %95 = vmatpush1.msra.mxu0 %v35
    %96 = vmatprep.subr.mxu0 0.0
    %97 = vmatpush1.msra.mxu0 %v34
    %98 = vmatprep.subr.mxu0 0.0
    %99 = vmatpush1.msra.mxu0 %v33
    %100 = vmatprep.subr.mxu0 0.0
    %101 = vmatpush1.msra.mxu0 %v32
    %102 = vmatprep.subr.mxu0 0.0
    %103 = vmatpush1.msra.mxu0 %v31
    %104 = vmatprep.subr.mxu0 0.0
    %105 = vmatpush1.msra.mxu0 %v30
    %106 = vmatprep.subr.mxu0 0.0
    %107 = vmatpush1.msra.mxu0 %v29
    %108 = vmatprep.subr.mxu0 0.0
    %109 = vmatpush1.msra.mxu0 %v28
    %110 = vmatprep.subr.mxu0 0.0
    %111 = vmatpush2.msra.mxu0 %v59
    %112 = vmatprep.subr.mxu0 0.0
    %113 = vmatpush2.msra.mxu0 %v58
    %114 = vmatprep.subr.mxu0 0.0
    %115 = vmatpush2.msra.mxu0 %v57
    %116 = vmatprep.subr.mxu0 0.0
    %117 = vmatpush2.msra.mxu0 %v56
    %118 = vmatprep.subr.mxu0 0.0
    %119 = vmatpush2.msra.mxu0 %v55
    %120 = vmatprep.subr.mxu0 0.0
    %121 = vmatpush2.msra.mxu0 %v54
    %122 = vmatprep.subr.mxu0 0.0
    %123 = vmatpush2.msra.mxu0 %v53
    %124 = vmatprep.subr.mxu0 0.0
    %125 = vmatpush2.msra.mxu0 %v52
    %126 = vmatprep.subr.mxu0 0.0
    %127 = vmatpush2.msra.mxu0 %v51
    %128 = vmatprep.subr.mxu0 0.0
    %129 = vmatpush2.msra.mxu0 %v50
    %130 = vmatprep.subr.mxu0 0.0
    %131 = vmatpush2.msra.mxu0 %v49
    %132 = vmatprep.subr.mxu0 0.0
    %133 = vmatpush2.msra.mxu0 %v48
    %134 = vmatprep.subr.mxu0 0.0
    %135 = vmatpush2.msra.mxu0 %v47
    %136 = vmatprep.subr.mxu0 0.0
    %137 = vmatpush2.msra.mxu0 %v46
    %138 = vmatprep.subr.mxu0 0.0
    %139 = vmatpush2.msra.mxu0 %v45
    %140 = vmatprep.subr.mxu0 0.0
    %141 = vmatpush2.msra.mxu0 %v44
    %142 = vmatprep.mubr.f32.mxu0 %v75
    %143 = vmatmul.mubr.f32.gmra.mxu0 %v74
    %v144 = vpop.f32.mrf.mxu0
    %v145 = vadd.f32 %v65, %v144
    %v146 = vpop.f32.mrf.mxu0
    %147 = vdwg.mxu0
    %v148 = vmax.f32 %v145, 0.0
    %v149 = vld [vmem:[%s3] sm:$0xff]
    %v150 = vld [vmem:[%s3 + $0x8] sm:$0xff]
    %v151 = vld [vmem:[%s3 + $0x10] sm:$0xff]
    %v152 = vld [vmem:[%s3 + $0x18] sm:$0xff]
    %v153 = vld [vmem:[%s3 + $0x20] sm:$0xff]
    %v154 = vld [vmem:[%s3 + $0x28] sm:$0xff]
    %v155 = vld [vmem:[%s3 + $0x30] sm:$0xff]
    %v156 = vld [vmem:[%s3 + $0x38] sm:$0xff]
    %v157 = vld [vmem:[%s3 + $0x40] sm:$0xff]
    %v158 = vld [vmem:[%s3 + $0x48] sm:$0xff]
    %v159 = vld [vmem:[%s3 + $0x50] sm:$0xff]
    %v160 = vld [vmem:[%s3 + $0x58] sm:$0xff]
    %v161 = vld [vmem:[%s3 + $0x60] sm:$0xff]
    %v162 = vld [vmem:[%s3 + $0x68] sm:$0xff]
    %v163 = vld [vmem:[%s3 + $0x70] sm:$0xff]
    %v164 = vld [vmem:[%s3 + $0x78] sm:$0xff]
    %v165 = vld [vmem:[%s4] sm:$0x1]
    %v167 = vlaneseq
    %v168 = vshrl.u32 %v167, 7
    %v169 = vsub.s32 0, %v168
    %v170 = vrot.slane %v165, %v169
    %172 = vmatprep.subr.mxu0 0.0
    %173 = vmatpush1.msra.mxu0 %v164
    %174 = vmatprep.subr.mxu0 0.0
    %175 = vmatpush1.msra.mxu0 %v163
    %176 = vmatprep.subr.mxu0 0.0
    %177 = vmatpush1.msra.mxu0 %v162
    %178 = vmatprep.subr.mxu0 0.0
    %179 = vmatpush1.msra.mxu0 %v161
    %180 = vmatprep.subr.mxu0 0.0
    %181 = vmatpush1.msra.mxu0 %v160
    %182 = vmatprep.subr.mxu0 0.0
    %183 = vmatpush1.msra.mxu0 %v159
    %184 = vmatprep.subr.mxu0 0.0
    %185 = vmatpush1.msra.mxu0 %v158
    %186 = vmatprep.subr.mxu0 0.0
    %187 = vmatpush1.msra.mxu0 %v157
    %188 = vmatprep.subr.mxu0 0.0
    %189 = vmatpush1.msra.mxu0 %v156
    %190 = vmatprep.subr.mxu0 0.0
    %191 = vmatpush1.msra.mxu0 %v155
    %192 = vmatprep.subr.mxu0 0.0
    %193 = vmatpush1.msra.mxu0 %v154
    %194 = vmatprep.subr.mxu0 0.0
    %195 = vmatpush1.msra.mxu0 %v153
    %196 = vmatprep.subr.mxu0 0.0
    %197 = vmatpush1.msra.mxu0 %v152
    %198 = vmatprep.subr.mxu0 0.0
    %199 = vmatpush1.msra.mxu0 %v151
    %200 = vmatprep.subr.mxu0 0.0
    %201 = vmatpush1.msra.mxu0 %v150
    %202 = vmatprep.subr.mxu0 0.0
    %203 = vmatpush1.msra.mxu0 %v149
    %204 = vmatprep.subr.mxu0 0.0
    %205 = vmatpush2.msra.mxu0 0.0
    %206 = vmatprep.subr.mxu0 0.0
    %207 = vmatpush2.msra.mxu0 0.0
    %208 = vmatprep.subr.mxu0 0.0
    %209 = vmatpush2.msra.mxu0 0.0
    %210 = vmatprep.subr.mxu0 0.0
    %211 = vmatpush2.msra.mxu0 0.0
    %212 = vmatprep.subr.mxu0 0.0
    %213 = vmatpush2.msra.mxu0 0.0
    %214 = vmatprep.subr.mxu0 0.0
    %215 = vmatpush2.msra.mxu0 0.0
    %216 = vmatprep.subr.mxu0 0.0
    %217 = vmatpush2.msra.mxu0 0.0
    %218 = vmatprep.subr.mxu0 0.0
    %219 = vmatpush2.msra.mxu0 0.0
    %220 = vmatprep.subr.mxu0 0.0
    %221 = vmatpush2.msra.mxu0 0.0
    %222 = vmatprep.subr.mxu0 0.0
    %223 = vmatpush2.msra.mxu0 0.0
    %224 = vmatprep.subr.mxu0 0.0
    %225 = vmatpush2.msra.mxu0 0.0
    %226 = vmatprep.subr.mxu0 0.0
    %227 = vmatpush2.msra.mxu0 0.0
    %228 = vmatprep.subr.mxu0 0.0
    %229 = vmatpush2.msra.mxu0 0.0
    %230 = vmatprep.subr.mxu0 0.0
    %231 = vmatpush2.msra.mxu0 0.0
    %232 = vmatprep.subr.mxu0 0.0
    %233 = vmatpush2.msra.mxu0 0.0
    %234 = vmatprep.subr.mxu0 0.0
    %235 = vmatpush2.msra.mxu0 0.0
    %236 = vmatprep.mubr.f32.mxu0 0.0
    %237 = vmatmul.mubr.f32.gmra.mxu0 %v148
    %v238 = vpop.f32.mrf.mxu0
    %v239 = vadd.f32 %v170, %v238
    %v240 = vpop.f32.mrf.mxu0
    %241 = vdwg.mxu0
    %v242 = vmax.f32 %v239, 0.0
    %v243 = vld [vmem:[%s5] sm:$0xff]
    %v244 = vld [vmem:[%s5 + $0x8] sm:$0xff]
    %v245 = vld [vmem:[%s5 + $0x10] sm:$0xff]
    %v246 = vld [vmem:[%s5 + $0x18] sm:$0xff]
    %v247 = vld [vmem:[%s5 + $0x20] sm:$0xff]
    %v248 = vld [vmem:[%s5 + $0x28] sm:$0xff]
    %v249 = vld [vmem:[%s5 + $0x30] sm:$0xff]
    %v250 = vld [vmem:[%s5 + $0x38] sm:$0xff]
    %v251 = vld [vmem:[%s5 + $0x40] sm:$0xff]
    %v252 = vld [vmem:[%s5 + $0x48] sm:$0xff]
    %v253 = vld [vmem:[%s5 + $0x50] sm:$0xff]
    %v254 = vld [vmem:[%s5 + $0x58] sm:$0xff]
    %v255 = vld [vmem:[%s5 + $0x60] sm:$0xff]
    %v256 = vld [vmem:[%s5 + $0x68] sm:$0xff]
    %v257 = vld [vmem:[%s5 + $0x70] sm:$0xff]
    %v258 = vld [vmem:[%s5 + $0x78] sm:$0xff]
    %v259 = vld [vmem:[%s6] sm:$0x1]
    %v261 = vlaneseq
    %v262 = vshrl.u32 %v261, 7
    %v263 = vsub.s32 0, %v262
    %v264 = vrot.slane %v259, %v263
    %266 = vmatprep.subr.mxu0 0.0
    %267 = vmatpush1.msra.mxu0 %v258
    %268 = vmatprep.subr.mxu0 0.0
    %269 = vmatpush1.msra.mxu0 %v257
    %270 = vmatprep.subr.mxu0 0.0
    %271 = vmatpush1.msra.mxu0 %v256
    %272 = vmatprep.subr.mxu0 0.0
    %273 = vmatpush1.msra.mxu0 %v255
    %274 = vmatprep.subr.mxu0 0.0
    %275 = vmatpush1.msra.mxu0 %v254
    %276 = vmatprep.subr.mxu0 0.0
    %277 = vmatpush1.msra.mxu0 %v253
    %278 = vmatprep.subr.mxu0 0.0
    %279 = vmatpush1.msra.mxu0 %v252
    %280 = vmatprep.subr.mxu0 0.0
    %281 = vmatpush1.msra.mxu0 %v251
    %282 = vmatprep.subr.mxu0 0.0
    %283 = vmatpush1.msra.mxu0 %v250
    %284 = vmatprep.subr.mxu0 0.0
    %285 = vmatpush1.msra.mxu0 %v249
    %286 = vmatprep.subr.mxu0 0.0
    %287 = vmatpush1.msra.mxu0 %v248
    %288 = vmatprep.subr.mxu0 0.0
    %289 = vmatpush1.msra.mxu0 %v247
    %290 = vmatprep.subr.mxu0 0.0
    %291 = vmatpush1.msra.mxu0 %v246
    %292 = vmatprep.subr.mxu0 0.0
    %293 = vmatpush1.msra.mxu0 %v245
    %294 = vmatprep.subr.mxu0 0.0
    %295 = vmatpush1.msra.mxu0 %v244
    %296 = vmatprep.subr.mxu0 0.0
    %297 = vmatpush1.msra.mxu0 %v243
    %298 = vmatprep.subr.mxu0 0.0
    %299 = vmatpush2.msra.mxu0 0.0
    %300 = vmatprep.subr.mxu0 0.0
    %301 = vmatpush2.msra.mxu0 0.0
    %302 = vmatprep.subr.mxu0 0.0
    %303 = vmatpush2.msra.mxu0 0.0
    %304 = vmatprep.subr.mxu0 0.0
    %305 = vmatpush2.msra.mxu0 0.0
    %306 = vmatprep.subr.mxu0 0.0
    %307 = vmatpush2.msra.mxu0 0.0
    %308 = vmatprep.subr.mxu0 0.0
    %309 = vmatpush2.msra.mxu0 0.0
    %310 = vmatprep.subr.mxu0 0.0
    %311 = vmatpush2.msra.mxu0 0.0
    %312 = vmatprep.subr.mxu0 0.0
    %313 = vmatpush2.msra.mxu0 0.0
    %314 = vmatprep.subr.mxu0 0.0
    %315 = vmatpush2.msra.mxu0 0.0
    %316 = vmatprep.subr.mxu0 0.0
    %317 = vmatpush2.msra.mxu0 0.0
    %318 = vmatprep.subr.mxu0 0.0
    %319 = vmatpush2.msra.mxu0 0.0
    %320 = vmatprep.subr.mxu0 0.0
    %321 = vmatpush2.msra.mxu0 0.0
    %322 = vmatprep.subr.mxu0 0.0
    %323 = vmatpush2.msra.mxu0 0.0
    %324 = vmatprep.subr.mxu0 0.0
    %325 = vmatpush2.msra.mxu0 0.0
    %326 = vmatprep.subr.mxu0 0.0
    %327 = vmatpush2.msra.mxu0 0.0
    %328 = vmatprep.subr.mxu0 0.0
    %329 = vmatpush2.msra.mxu0 0.0
    %330 = vmatprep.mubr.f32.mxu0 0.0
    %331 = vmatmul.mubr.f32.gmra.mxu0 %v242
    %v332 = vpop.f32.mrf.mxu0
    %v333 = vadd.f32 %v264, %v332
    %v334 = vpop.f32.mrf.mxu0
    %335 = vdwg.mxu0
    %v336 = vmax.f32 %v333, 0.0
    %v337 = vlaneseq
    %v338 = vand.u32 %v337, 127
    %vm339 = vcmp.lt.s32.totalorder %v338, 10
    %v340 = vsel %vm339, %v336, -1e+30
    %vm341 = vcmask 1041408
    %v342 = vsel %vm341, %v340, -inf
    %343 = vmax.xlane.f32.xlu0 %v342
    %v344 = vpop.xlane.xlu0 %343
    %v345 = vsub.f32 %v340, %v344
    %v346 = vmul.f32 %v345, 1.442695
    %v347 = vpow.pop %v346
    %v348 = vsel %vm341, %v347, 0.0
    %349 = vadd.xlane.f32.xlu0 %v348
    %v350 = vpop.xlane.xlu0 %349
    %v351 = vlog2.pop %v350
    %v352 = vmul.f32 %v351, 0.6931472
    %v353 = vsub.f32 %v345, %v352
    %354 = vst [vmem:[#allocation2] sm:$0x3] %v353
    // Predicated region
    $region30: #{convnet_forward.5} parent=1 // pred_check
      _
    $region31: #{convnet_forward.5} parent=1 // pred_check_branch
      %356 = sbr.rel (0) target = $region33
    $region32: #{convnet_forward.5} parent=1 // pred_region
      %s358 = ssub.s32 32, 32
      %359 = vsyncadd [#allocation3], %s358
      %s361 = sshll.u32 [#allocation2], 4
      %s362 = int_to_ptr.vmem [resolvable:$true] %s361
      %364 = dma.vmem_to_hbm [thread:$0]  %s362, 32, %s7, [#allocation3]
    $region33: #{convnet_forward.5} parent=1 // pred_fallthru
      _
    // Predicated region
    $region34: #{convnet_forward.5} parent=1 // pred_check
      _
    $region35: #{convnet_forward.5} parent=1 // pred_check_branch
      %366 = sbr.rel (0) target = $region37
    $region36: #{convnet_forward.5} parent=1 // pred_region
      %367 = dma.done [#allocation3], 32
    $region37: #{convnet_forward.5} parent=1 // pred_fallthru
      _
    %368 = vsyncpa [#allocation3], 1

</llo_original>
